<compile_context>
chip_gen: v6e
topology: v6e:2x2x1
jax: 0.10.0
libtpu: 0.0.40
codegen_flags: <defaults>
</compile_context>

<pallas_src>
import numpy as np
import jax
import jax.numpy as jnp
from jax.experimental import pallas as pl
from jax.experimental.pallas import tpu as pltpu


# --------------------------------------------------------------------------
# Pallas kernel #1: batched 3x3 box filter + spectral residual (fused).
# Input: replicate-padded log-amplitude (B, rh+2, rw+2).
# Output: residual = log_amp - boxFilter3x3(log_amp), shape (B, rh, rw).
# --------------------------------------------------------------------------
def _make_box_residual(B, rh, rw):
    def kern(pad_ref, out_ref):
        img = pad_ref[...]                                   # (B, rh+2, rw+2)
        acc = jnp.zeros((B, rh, rw), jnp.float32)
        for u in range(3):                                   # fully unrolled
            for v in range(3):
                acc = acc + img[:, u:u + rh, v:v + rw]
        out_ref[...] = img[:, 1:rh + 1, 1:rw + 1] - acc * (1.0 / 9.0)

    return pl.pallas_call(
        kern,
        out_shape=jax.ShapeDtypeStruct((B, rh, rw), jnp.float32),
        in_specs=[pl.BlockSpec(memory_space=pltpu.MemorySpace.VMEM)],
        out_specs=pl.BlockSpec(memory_space=pltpu.MemorySpace.VMEM),
    )


# --------------------------------------------------------------------------
# Pallas kernel #2: batched separable 9x9 Gaussian blur + L2 row-normalize.
# Input: reflect-101 padded saliency (B, rh+8, rw+8).
# Sublane (vertical) pass first, lane (horizontal) pass second (best on v5e),
# then torch.nn.functional.normalize semantics: row / max(||row||_2, 1e-12).
# --------------------------------------------------------------------------
def _make_gauss_norm(B, rh, rw, g1d):
    taps = [float(c) for c in g1d]
    k = len(taps)                                            # 9

    def kern(pad_ref, out_ref):
        img = pad_ref[...]                                   # (B, rh+8, rw+8)
        # vertical pass: sublane-direction slices (cheap row addressing)
        tmp = taps[0] * img[:, 0:rh, :]
        for u in range(1, k):
            tmp = tmp + taps[u] * img[:, u:u + rh, :]        # (B, rh, rw+8)
        # horizontal pass: 9 lane-offset slices
        blur = taps[0] * tmp[:, :, 0:rw]
        for v in range(1, k):
            blur = blur + taps[v] * tmp[:, :, v:v + rw]      # (B, rh, rw)
        # fused L2 row-normalization (XLU reduce + sqrt, free alongside taps)
        norm = jnp.sqrt(jnp.sum(blur * blur, axis=-1, keepdims=True))
        out_ref[...] = blur / jnp.maximum(norm, 1e-12)

    return pl.pallas_call(
        kern,
        out_shape=jax.ShapeDtypeStruct((B, rh, rw), jnp.float32),
        in_specs=[pl.BlockSpec(memory_space=pltpu.MemorySpace.VMEM)],
        out_specs=pl.BlockSpec(memory_space=pltpu.MemorySpace.VMEM),
    )


# --------------------------------------------------------------------------
# Pallas kernel #3: fused SR-SIM core for the image pair (single launch).
#   - gradient maps of both images via 3x3 (flipped, true-convolution)
#     Scharr-like kernels on the zero-padded planes,
#   - saliency similarity, gradient similarity, Rm = max(s1, s2),
#   - weighted reduction:  num = sum(Sim * Rm),  den = sum(Rm).
# Divisions use pl.reciprocal(..., approx=True) -> EUP slot.
# --------------------------------------------------------------------------
_DX = np.array([[3.0, 0.0, -3.0],
                [10.0, 0.0, -10.0],
                [3.0, 0.0, -3.0]], np.float32) / 16.0
_DY = np.array([[3.0, 10.0, 3.0],
                [0.0, 0.0, 0.0],
                [-3.0, -10.0, -3.0]], np.float32) / 16.0


def _srsim_reduce(yp, sal):
    B, Hp, Wp = yp.shape
    H, W = Hp - 2, Wp - 2
    # scipy.signal.convolve is a true convolution -> flip the kernels.
    fdx = _DX[::-1, ::-1]
    fdy = _DY[::-1, ::-1]
    taps = [(u, v, float(fdx[u, v]), float(fdy[u, v]))
            for u in range(3) for v in range(3)]

    C1 = 0.4
    C2 = 225.0  # alpha = 0.5 -> sqrt

    def kern(yp_ref, sal_ref, num_ref, den_ref):
        ypv = yp_ref[...]                                    # (2, H+2, W+2)
        ix = jnp.zeros((B, H, W), jnp.float32)
        iy = jnp.zeros((B, H, W), jnp.float32)
        for u, v, cx, cy in taps:                            # fully unrolled
            sl = ypv[:, u:u + H, v:v + W]
            if cx != 0.0:
                ix = ix + cx * sl
            if cy != 0.0:
                iy = iy + cy * sl
        g = jnp.sqrt(ix * ix + iy * iy)                      # (2, H, W)

        s = sal_ref[...]
        s1, s2 = s[0], s[1]
        g1, g2 = g[0], g[1]

        gbvs_sim = (2.0 * s1 * s2 + C1) * pl.reciprocal(
            s1 * s1 + s2 * s2 + C1, approx=True)
        grad_sim = (2.0 * g1 * g2 + C2) * pl.reciprocal(
            g1 * g1 + g2 * g2 + C2, approx=True)
        rm = jnp.maximum(s1, s2)
        sim = gbvs_sim * jnp.sqrt(grad_sim)                  # ** alpha (0.5)

        num_ref[0, 0] = jnp.sum(sim * rm)
        den_ref[0, 0] = jnp.sum(rm)

    num, den = pl.pallas_call(
        kern,
        out_shape=(jax.ShapeDtypeStruct((1, 1), jnp.float32),
                   jax.ShapeDtypeStruct((1, 1), jnp.float32)),
        in_specs=[pl.BlockSpec(memory_space=pltpu.MemorySpace.VMEM)] * 2,
        out_specs=(pl.BlockSpec(memory_space=pltpu.MemorySpace.SMEM),
                   pl.BlockSpec(memory_space=pltpu.MemorySpace.SMEM)),
    )(yp, sal)
    return num[0, 0], den[0, 0]


# --------------------------------------------------------------------------
# Glue (all fused under one jax.jit): batched spectral-residual saliency,
# downsample, sr_sim, loss wrapper.
# --------------------------------------------------------------------------
def _gaussian_kernel_1d(ksize: int, sigma: float) -> np.ndarray:
    x = np.arange(ksize, dtype=np.float64) - (ksize - 1) / 2.0
    g = np.exp(-(x ** 2) / (2.0 * sigma ** 2))
    return (g / g.sum()).astype(np.float32)


def _spectral_residue_saliency_batched(Y):
    """Spectral residual saliency (Hou & Zhang) for a batch of planes (B,H,W)."""
    scale = 0.25
    gau_sigma = 3.8
    gau_size = 9
    B, H, W = Y.shape
    rh = int(np.floor(scale * H + 0.5))
    rw = int(np.floor(scale * W + 0.5))

    # TODO(synk): cv2.INTER_CUBIC (a=-0.75, no antialias) differs slightly from
    # jax.image cubic (Keys a=-0.5, antialiased); semantics otherwise identical.
    in_img = jax.vmap(lambda im: jax.image.resize(im, (rh, rw), method='cubic'))(Y)

    fft = jnp.fft.fft2(in_img, axes=(-2, -1))                # one batched FFT
    amp = jnp.maximum(jnp.abs(fft), 1e-30)                   # avoid log(0) -> -inf
    log_amp = jnp.log(amp)
    phase = jnp.angle(fft)

    # fused: 3x3 normalized box filter (replicate border) + residual subtraction
    la_pad = jnp.pad(log_amp, ((0, 0), (1, 1), (1, 1)), mode='edge')
    residual = _make_box_residual(B, rh, rw)(la_pad)

    sal = jnp.abs(jnp.fft.ifft2(jnp.exp(residual + 1j * phase), axes=(-2, -1))) ** 2

    # fused: separable 9x9 Gaussian (sigma 3.8, reflect-101 border) + L2 row norm
    g1d = _gaussian_kernel_1d(gau_size, gau_sigma)
    p = gau_size // 2
    sal_pad = jnp.pad(sal, ((0, 0), (p, p), (p, p)), mode='reflect')
    sal_n = _make_gauss_norm(B, rh, rw, g1d)(sal_pad)

    # TODO(synk): cv2.resize INTER_LINEAR half-pixel alignment differs slightly
    # from jax.image 'linear'.
    return jax.vmap(lambda im: jax.image.resize(im, (H, W), method='linear'))(sal_n)


def _downsample_batched(Y, F):
    if F == 1:
        return Y
    # TODO(synk): reference downsample/conv2d_same is malformed for F>1; a sane
    # FxF average + stride-F subsample is used here (F==1 for small images).
    B, H, W = Y.shape
    p = (F - 1) // 2
    pad = jnp.pad(Y, ((0, 0), (p, p), (p, p)), mode='reflect')
    out_h, out_w = H + 2 * p - F + 1, W + 2 * p - F + 1
    acc = jnp.zeros((B, out_h, out_w), jnp.float32)
    for u in range(F):
        for v in range(F):
            acc = acc + pad[:, u:u + out_h, v:v + out_w]
    return (acc / float(F * F))[:, ::F, ::F]


def _sr_sim_core(image1, image2):
    """SR-SIM index between two grayscale (H, W) images (traceable, jit-able)."""
    if image1.shape != image2.shape:
        raise ValueError('Image 1 and 2 must be of same shape')
    # TODO(synk): RGB (ndim==3) YIQ chroma path not implemented; grayscale only.
    Y = jnp.stack([image1.astype(jnp.float32),
                   image2.astype(jnp.float32)], axis=0)      # (2, H, W)

    min_dim = min(image1.shape[0], image1.shape[1])
    F = max(1, int(round(min_dim / 256)))
    Y = _downsample_batched(Y, F)

    sal = _spectral_residue_saliency_batched(Y)              # (2, Hd, Wd)

    # scipy.signal.convolve(..., 'same') uses zero padding of 1 for a 3x3 kernel.
    # (Pad is fused inside the jit; negligible at these plane sizes.)
    yp = jnp.pad(Y, ((0, 0), (1, 1), (1, 1)))

    num, den = _srsim_reduce(yp, sal)
    return num / den


# One jit region for the whole loss (biggest wall-clock lever at these sizes).
_srsim_score_jit = jax.jit(_sr_sim_core)
_srsim_loss_jit = jax.jit(lambda x, y: 1.0 - jnp.mean(_sr_sim_core(x, y)))


def sr_sim(image1, image2):
    return _srsim_score_jit(image1, image2)


class SRSIMLoss:
    """JAX equivalent of SR_SIMLoss: returns 1 - mean(SR_SIM(x, y))."""

    def __init__(self, reduction: str = 'mean', data_range: float = 1.0):
        # TODO(synk): data_range kept for API parity; the reference sr_sim never
        # rescales by it either (C1/C2 are as in the original code).
        self.reduction = reduction
        self.data_range = data_range

    def __call__(self, x, y, as_loss: bool = True):
        assert x.shape == y.shape
        if as_loss:
            return _srsim_loss_jit(x, y)
        return _srsim_score_jit(x, y)


if __name__ == "__main__":
    key = jax.random.PRNGKey(0)
    kx, ky = jax.random.split(key)
    H, W = 64, 64                       # grayscale images; resized 0.25x -> 16x16
    x = jax.random.uniform(kx, (H, W), dtype=jnp.float32)
    y = jax.random.uniform(ky, (H, W), dtype=jnp.float32)

    loss_fn = SRSIMLoss()
    loss = loss_fn(x, y, as_loss=True)
    jax.block_until_ready(loss)
    score = loss_fn(x, y, as_loss=False)
    jax.block_until_ready(score)
    print("KERNEL_OK")
</pallas_src>

<mosaic_0001>
module attributes {stable_mosaic.version = 11 : i64} {
  func.func @kern(%arg0: memref<2x18x18xf32, #tpu.memory_space<vmem>>, %arg1: memref<2x16x16xf32, #tpu.memory_space<vmem>>) attributes {dimension_semantics = [], scalar_prefetch = 0 : i64, scratch_operands = 0 : i64, tpu.core_type = #tpu.core_type<tc>} {
    %c0 = arith.constant 0 : index
    %c0_0 = arith.constant 0 : index
    %c0_1 = arith.constant 0 : index
    %0 = vector.load %arg0[%c0, %c0_0, %c0_1] : memref<2x18x18xf32, #tpu.memory_space<vmem>>, vector<2x18x18xf32>
    %cst = arith.constant 0.000000e+00 : f32
    %1 = vector.broadcast %cst : f32 to vector<2x16x16xf32>
    %2 = vector.extract_strided_slice %0 {offsets = [0, 0, 0], sizes = [2, 16, 16], strides = [1, 1, 1]} : vector<2x18x18xf32> to vector<2x16x16xf32>
    %3 = arith.addf %1, %2 : vector<2x16x16xf32>
    %4 = vector.extract_strided_slice %0 {offsets = [0, 0, 1], sizes = [2, 16, 16], strides = [1, 1, 1]} : vector<2x18x18xf32> to vector<2x16x16xf32>
    %5 = arith.addf %3, %4 : vector<2x16x16xf32>
    %6 = vector.extract_strided_slice %0 {offsets = [0, 0, 2], sizes = [2, 16, 16], strides = [1, 1, 1]} : vector<2x18x18xf32> to vector<2x16x16xf32>
    %7 = arith.addf %5, %6 : vector<2x16x16xf32>
    %8 = vector.extract_strided_slice %0 {offsets = [0, 1, 0], sizes = [2, 16, 16], strides = [1, 1, 1]} : vector<2x18x18xf32> to vector<2x16x16xf32>
    %9 = arith.addf %7, %8 : vector<2x16x16xf32>
    %10 = vector.extract_strided_slice %0 {offsets = [0, 1, 1], sizes = [2, 16, 16], strides = [1, 1, 1]} : vector<2x18x18xf32> to vector<2x16x16xf32>
    %11 = arith.addf %9, %10 : vector<2x16x16xf32>
    %12 = vector.extract_strided_slice %0 {offsets = [0, 1, 2], sizes = [2, 16, 16], strides = [1, 1, 1]} : vector<2x18x18xf32> to vector<2x16x16xf32>
    %13 = arith.addf %11, %12 : vector<2x16x16xf32>
    %14 = vector.extract_strided_slice %0 {offsets = [0, 2, 0], sizes = [2, 16, 16], strides = [1, 1, 1]} : vector<2x18x18xf32> to vector<2x16x16xf32>
    %15 = arith.addf %13, %14 : vector<2x16x16xf32>
    %16 = vector.extract_strided_slice %0 {offsets = [0, 2, 1], sizes = [2, 16, 16], strides = [1, 1, 1]} : vector<2x18x18xf32> to vector<2x16x16xf32>
    %17 = arith.addf %15, %16 : vector<2x16x16xf32>
    %18 = vector.extract_strided_slice %0 {offsets = [0, 2, 2], sizes = [2, 16, 16], strides = [1, 1, 1]} : vector<2x18x18xf32> to vector<2x16x16xf32>
    %19 = arith.addf %17, %18 : vector<2x16x16xf32>
    %20 = vector.extract_strided_slice %0 {offsets = [0, 1, 1], sizes = [2, 16, 16], strides = [1, 1, 1]} : vector<2x18x18xf32> to vector<2x16x16xf32>
    %cst_2 = arith.constant 0.111111112 : f32
    %21 = vector.broadcast %cst_2 : f32 to vector<2x16x16xf32>
    %22 = arith.mulf %19, %21 : vector<2x16x16xf32>
    %23 = arith.subf %20, %22 : vector<2x16x16xf32>
    %c0_3 = arith.constant 0 : index
    %c0_4 = arith.constant 0 : index
    %c0_5 = arith.constant 0 : index
    %24 = vector.load %arg1[%c0_3, %c0_4, %c0_5] : memref<2x16x16xf32, #tpu.memory_space<vmem>>, vector<2x16x16xf32>
    tpu.vector_store %arg1[%c0_3, %c0_4, %c0_5], %23 {strides = array<i32>} : memref<2x16x16xf32, #tpu.memory_space<vmem>>, vector<2x16x16xf32>,
    return
  }
}

module attributes {stable_mosaic.version = 11 : i64} {
  func.func @kern(%arg0: memref<2x24x24xf32, #tpu.memory_space<vmem>>, %arg1: memref<2x16x16xf32, #tpu.memory_space<vmem>>) attributes {dimension_semantics = [], scalar_prefetch = 0 : i64, scratch_operands = 0 : i64, tpu.core_type = #tpu.core_type<tc>} {
    %c0 = arith.constant 0 : index
    %c0_0 = arith.constant 0 : index
    %c0_1 = arith.constant 0 : index
    %0 = vector.load %arg0[%c0, %c0_0, %c0_1] : memref<2x24x24xf32, #tpu.memory_space<vmem>>, vector<2x24x24xf32>
    %1 = vector.extract_strided_slice %0 {offsets = [0, 0, 0], sizes = [2, 16, 24], strides = [1, 1, 1]} : vector<2x24x24xf32> to vector<2x16x24xf32>
    %cst = arith.constant 0.0788575708 : f32
    %2 = vector.broadcast %cst : f32 to vector<2x16x24xf32>
    %3 = arith.mulf %2, %1 : vector<2x16x24xf32>
    %4 = vector.extract_strided_slice %0 {offsets = [0, 1, 0], sizes = [2, 16, 24], strides = [1, 1, 1]} : vector<2x24x24xf32> to vector<2x16x24xf32>
    %cst_2 = arith.constant 0.100486718 : f32
    %5 = vector.broadcast %cst_2 : f32 to vector<2x16x24xf32>
    %6 = arith.mulf %5, %4 : vector<2x16x24xf32>
    %7 = arith.addf %3, %6 : vector<2x16x24xf32>
    %8 = vector.extract_strided_slice %0 {offsets = [0, 2, 0], sizes = [2, 16, 24], strides = [1, 1, 1]} : vector<2x24x24xf32> to vector<2x16x24xf32>
    %cst_3 = arith.constant 0.119480811 : f32
    %9 = vector.broadcast %cst_3 : f32 to vector<2x16x24xf32>
    %10 = arith.mulf %9, %8 : vector<2x16x24xf32>
    %11 = arith.addf %7, %10 : vector<2x16x24xf32>
    %12 = vector.extract_strided_slice %0 {offsets = [0, 3, 0], sizes = [2, 16, 24], strides = [1, 1, 1]} : vector<2x24x24xf32> to vector<2x16x24xf32>
    %cst_4 = arith.constant 0.132559806 : f32
    %13 = vector.broadcast %cst_4 : f32 to vector<2x16x24xf32>
    %14 = arith.mulf %13, %12 : vector<2x16x24xf32>
    %15 = arith.addf %11, %14 : vector<2x16x24xf32>
    %16 = vector.extract_strided_slice %0 {offsets = [0, 4, 0], sizes = [2, 16, 24], strides = [1, 1, 1]} : vector<2x24x24xf32> to vector<2x16x24xf32>
    %cst_5 = arith.constant 0.137230217 : f32
    %17 = vector.broadcast %cst_5 : f32 to vector<2x16x24xf32>
    %18 = arith.mulf %17, %16 : vector<2x16x24xf32>
    %19 = arith.addf %15, %18 : vector<2x16x24xf32>
    %20 = vector.extract_strided_slice %0 {offsets = [0, 5, 0], sizes = [2, 16, 24], strides = [1, 1, 1]} : vector<2x24x24xf32> to vector<2x16x24xf32>
    %cst_6 = arith.constant 0.132559806 : f32
    %21 = vector.broadcast %cst_6 : f32 to vector<2x16x24xf32>
    %22 = arith.mulf %21, %20 : vector<2x16x24xf32>
    %23 = arith.addf %19, %22 : vector<2x16x24xf32>
    %24 = vector.extract_strided_slice %0 {offsets = [0, 6, 0], sizes = [2, 16, 24], strides = [1, 1, 1]} : vector<2x24x24xf32> to vector<2x16x24xf32>
    %cst_7 = arith.constant 0.119480811 : f32
    %25 = vector.broadcast %cst_7 : f32 to vector<2x16x24xf32>
    %26 = arith.mulf %25, %24 : vector<2x16x24xf32>
    %27 = arith.addf %23, %26 : vector<2x16x24xf32>
    %28 = vector.extract_strided_slice %0 {offsets = [0, 7, 0], sizes = [2, 16, 24], strides = [1, 1, 1]} : vector<2x24x24xf32> to vector<2x16x24xf32>
    %cst_8 = arith.constant 0.100486718 : f32
    %29 = vector.broadcast %cst_8 : f32 to vector<2x16x24xf32>
    %30 = arith.mulf %29, %28 : vector<2x16x24xf32>
    %31 = arith.addf %27, %30 : vector<2x16x24xf32>
    %32 = vector.extract_strided_slice %0 {offsets = [0, 8, 0], sizes = [2, 16, 24], strides = [1, 1, 1]} : vector<2x24x24xf32> to vector<2x16x24xf32>
    %cst_9 = arith.constant 0.0788575708 : f32
    %33 = vector.broadcast %cst_9 : f32 to vector<2x16x24xf32>
    %34 = arith.mulf %33, %32 : vector<2x16x24xf32>
    %35 = arith.addf %31, %34 : vector<2x16x24xf32>
    %36 = vector.extract_strided_slice %35 {offsets = [0, 0, 0], sizes = [2, 16, 16], strides = [1, 1, 1]} : vector<2x16x24xf32> to vector<2x16x16xf32>
    %cst_10 = arith.constant 0.0788575708 : f32
    %37 = vector.broadcast %cst_10 : f32 to vector<2x16x16xf32>
    %38 = arith.mulf %37, %36 : vector<2x16x16xf32>
    %39 = vector.extract_strided_slice %35 {offsets = [0, 0, 1], sizes = [2, 16, 16], strides = [1, 1, 1]} : vector<2x16x24xf32> to vector<2x16x16xf32>
    %cst_11 = arith.constant 0.100486718 : f32
    %40 = vector.broadcast %cst_11 : f32 to vector<2x16x16xf32>
    %41 = arith.mulf %40, %39 : vector<2x16x16xf32>
    %42 = arith.addf %38, %41 : vector<2x16x16xf32>
    %43 = vector.extract_strided_slice %35 {offsets = [0, 0, 2], sizes = [2, 16, 16], strides = [1, 1, 1]} : vector<2x16x24xf32> to vector<2x16x16xf32>
    %cst_12 = arith.constant 0.119480811 : f32
    %44 = vector.broadcast %cst_12 : f32 to vector<2x16x16xf32>
    %45 = arith.mulf %44, %43 : vector<2x16x16xf32>
    %46 = arith.addf %42, %45 : vector<2x16x16xf32>
    %47 = vector.extract_strided_slice %35 {offsets = [0, 0, 3], sizes = [2, 16, 16], strides = [1, 1, 1]} : vector<2x16x24xf32> to vector<2x16x16xf32>
    %cst_13 = arith.constant 0.132559806 : f32
    %48 = vector.broadcast %cst_13 : f32 to vector<2x16x16xf32>
    %49 = arith.mulf %48, %47 : vector<2x16x16xf32>
    %50 = arith.addf %46, %49 : vector<2x16x16xf32>
    %51 = vector.extract_strided_slice %35 {offsets = [0, 0, 4], sizes = [2, 16, 16], strides = [1, 1, 1]} : vector<2x16x24xf32> to vector<2x16x16xf32>
    %cst_14 = arith.constant 0.137230217 : f32
    %52 = vector.broadcast %cst_14 : f32 to vector<2x16x16xf32>
    %53 = arith.mulf %52, %51 : vector<2x16x16xf32>
    %54 = arith.addf %50, %53 : vector<2x16x16xf32>
    %55 = vector.extract_strided_slice %35 {offsets = [0, 0, 5], sizes = [2, 16, 16], strides = [1, 1, 1]} : vector<2x16x24xf32> to vector<2x16x16xf32>
    %cst_15 = arith.constant 0.132559806 : f32
    %56 = vector.broadcast %cst_15 : f32 to vector<2x16x16xf32>
    %57 = arith.mulf %56, %55 : vector<2x16x16xf32>
    %58 = arith.addf %54, %57 : vector<2x16x16xf32>
    %59 = vector.extract_strided_slice %35 {offsets = [0, 0, 6], sizes = [2, 16, 16], strides = [1, 1, 1]} : vector<2x16x24xf32> to vector<2x16x16xf32>
    %cst_16 = arith.constant 0.119480811 : f32
    %60 = vector.broadcast %cst_16 : f32 to vector<2x16x16xf32>
    %61 = arith.mulf %60, %59 : vector<2x16x16xf32>
    %62 = arith.addf %58, %61 : vector<2x16x16xf32>
    %63 = vector.extract_strided_slice %35 {offsets = [0, 0, 7], sizes = [2, 16, 16], strides = [1, 1, 1]} : vector<2x16x24xf32> to vector<2x16x16xf32>
    %cst_17 = arith.constant 0.100486718 : f32
    %64 = vector.broadcast %cst_17 : f32 to vector<2x16x16xf32>
    %65 = arith.mulf %64, %63 : vector<2x16x16xf32>
    %66 = arith.addf %62, %65 : vector<2x16x16xf32>
    %67 = vector.extract_strided_slice %35 {offsets = [0, 0, 8], sizes = [2, 16, 16], strides = [1, 1, 1]} : vector<2x16x24xf32> to vector<2x16x16xf32>
    %cst_18 = arith.constant 0.0788575708 : f32
    %68 = vector.broadcast %cst_18 : f32 to vector<2x16x16xf32>
    %69 = arith.mulf %68, %67 : vector<2x16x16xf32>
    %70 = arith.addf %66, %69 : vector<2x16x16xf32>
    %71 = arith.mulf %70, %70 : vector<2x16x16xf32>
    %cst_19 = arith.constant dense<0.000000e+00> : vector<2x16xf32>
    %72 = vector.multi_reduction <add>, %71, %cst_19 [2] : vector<2x16x16xf32> to vector<2x16xf32>
    %73 = vector.shape_cast %72 : vector<2x16xf32> to vector<2x16x1xf32>
    %74 = math.sqrt %73 : vector<2x16x1xf32>
    %cst_20 = arith.constant 9.99999996E-13 : f32
    %75 = vector.broadcast %cst_20 : f32 to vector<2x16x1xf32>
    %76 = arith.maximumf %74, %75 : vector<2x16x1xf32>
    %77 = vector.broadcast %76 : vector<2x16x1xf32> to vector<2x16x16xf32>
    %78 = arith.divf %70, %77 : vector<2x16x16xf32>
    %c0_21 = arith.constant 0 : index
    %c0_22 = arith.constant 0 : index
    %c0_23 = arith.constant 0 : index
    %79 = vector.load %arg1[%c0_21, %c0_22, %c0_23] : memref<2x16x16xf32, #tpu.memory_space<vmem>>, vector<2x16x16xf32>
    tpu.vector_store %arg1[%c0_21, %c0_22, %c0_23], %78 {strides = array<i32>} : memref<2x16x16xf32, #tpu.memory_space<vmem>>, vector<2x16x16xf32>,
    return
  }
}

module attributes {stable_mosaic.version = 11 : i64} {
  func.func @kern(%arg0: memref<2x66x66xf32, #tpu.memory_space<vmem>>, %arg1: memref<2x64x64xf32, #tpu.memory_space<vmem>>, %arg2: memref<1x1xf32, #tpu.memory_space<smem>>, %arg3: memref<1x1xf32, #tpu.memory_space<smem>>) attributes {dimension_semantics = [], scalar_prefetch = 0 : i64, scratch_operands = 0 : i64, tpu.core_type = #tpu.core_type<tc>} {
    %c0 = arith.constant 0 : index
    %c0_0 = arith.constant 0 : index
    %c0_1 = arith.constant 0 : index
    %0 = vector.load %arg0[%c0, %c0_0, %c0_1] : memref<2x66x66xf32, #tpu.memory_space<vmem>>, vector<2x66x66xf32>
    %cst = arith.constant 0.000000e+00 : f32
    %1 = vector.broadcast %cst : f32 to vector<2x64x64xf32>
    %cst_2 = arith.constant 0.000000e+00 : f32
    %2 = vector.broadcast %cst_2 : f32 to vector<2x64x64xf32>
    %3 = vector.extract_strided_slice %0 {offsets = [0, 0, 0], sizes = [2, 64, 64], strides = [1, 1, 1]} : vector<2x66x66xf32> to vector<2x64x64xf32>
    %cst_3 = arith.constant -1.875000e-01 : f32
    %4 = vector.broadcast %cst_3 : f32 to vector<2x64x64xf32>
    %5 = arith.mulf %4, %3 : vector<2x64x64xf32>
    %6 = arith.addf %1, %5 : vector<2x64x64xf32>
    %cst_4 = arith.constant -1.875000e-01 : f32
    %7 = vector.broadcast %cst_4 : f32 to vector<2x64x64xf32>
    %8 = arith.mulf %7, %3 : vector<2x64x64xf32>
    %9 = arith.addf %2, %8 : vector<2x64x64xf32>
    %10 = vector.extract_strided_slice %0 {offsets = [0, 0, 1], sizes = [2, 64, 64], strides = [1, 1, 1]} : vector<2x66x66xf32> to vector<2x64x64xf32>
    %cst_5 = arith.constant -6.250000e-01 : f32
    %11 = vector.broadcast %cst_5 : f32 to vector<2x64x64xf32>
    %12 = arith.mulf %11, %10 : vector<2x64x64xf32>
    %13 = arith.addf %9, %12 : vector<2x64x64xf32>
    %14 = vector.extract_strided_slice %0 {offsets = [0, 0, 2], sizes = [2, 64, 64], strides = [1, 1, 1]} : vector<2x66x66xf32> to vector<2x64x64xf32>
    %cst_6 = arith.constant 1.875000e-01 : f32
    %15 = vector.broadcast %cst_6 : f32 to vector<2x64x64xf32>
    %16 = arith.mulf %15, %14 : vector<2x64x64xf32>
    %17 = arith.addf %6, %16 : vector<2x64x64xf32>
    %cst_7 = arith.constant -1.875000e-01 : f32
    %18 = vector.broadcast %cst_7 : f32 to vector<2x64x64xf32>
    %19 = arith.mulf %18, %14 : vector<2x64x64xf32>
    %20 = arith.addf %13, %19 : vector<2x64x64xf32>
    %21 = vector.extract_strided_slice %0 {offsets = [0, 1, 0], sizes = [2, 64, 64], strides = [1, 1, 1]} : vector<2x66x66xf32> to vector<2x64x64xf32>
    %cst_8 = arith.constant -6.250000e-01 : f32
    %22 = vector.broadcast %cst_8 : f32 to vector<2x64x64xf32>
    %23 = arith.mulf %22, %21 : vector<2x64x64xf32>
    %24 = arith.addf %17, %23 : vector<2x64x64xf32>
    %25 = vector.extract_strided_slice %0 {offsets = [0, 1, 2], sizes = [2, 64, 64], strides = [1, 1, 1]} : vector<2x66x66xf32> to vector<2x64x64xf32>
    %cst_9 = arith.constant 6.250000e-01 : f32
    %26 = vector.broadcast %cst_9 : f32 to vector<2x64x64xf32>
    %27 = arith.mulf %26, %25 : vector<2x64x64xf32>
    %28 = arith.addf %24, %27 : vector<2x64x64xf32>
    %29 = vector.extract_strided_slice %0 {offsets = [0, 2, 0], sizes = [2, 64, 64], strides = [1, 1, 1]} : vector<2x66x66xf32> to vector<2x64x64xf32>
    %cst_10 = arith.constant -1.875000e-01 : f32
    %30 = vector.broadcast %cst_10 : f32 to vector<2x64x64xf32>
    %31 = arith.mulf %30, %29 : vector<2x64x64xf32>
    %32 = arith.addf %28, %31 : vector<2x64x64xf32>
    %cst_11 = arith.constant 1.875000e-01 : f32
    %33 = vector.broadcast %cst_11 : f32 to vector<2x64x64xf32>
    %34 = arith.mulf %33, %29 : vector<2x64x64xf32>
    %35 = arith.addf %20, %34 : vector<2x64x64xf32>
    %36 = vector.extract_strided_slice %0 {offsets = [0, 2, 1], sizes = [2, 64, 64], strides = [1, 1, 1]} : vector<2x66x66xf32> to vector<2x64x64xf32>
    %cst_12 = arith.constant 6.250000e-01 : f32
    %37 = vector.broadcast %cst_12 : f32 to vector<2x64x64xf32>
    %38 = arith.mulf %37, %36 : vector<2x64x64xf32>
    %39 = arith.addf %35, %38 : vector<2x64x64xf32>
    %40 = vector.extract_strided_slice %0 {offsets = [0, 2, 2], sizes = [2, 64, 64], strides = [1, 1, 1]} : vector<2x66x66xf32> to vector<2x64x64xf32>
    %cst_13 = arith.constant 1.875000e-01 : f32
    %41 = vector.broadcast %cst_13 : f32 to vector<2x64x64xf32>
    %42 = arith.mulf %41, %40 : vector<2x64x64xf32>
    %43 = arith.addf %32, %42 : vector<2x64x64xf32>
    %cst_14 = arith.constant 1.875000e-01 : f32
    %44 = vector.broadcast %cst_14 : f32 to vector<2x64x64xf32>
    %45 = arith.mulf %44, %40 : vector<2x64x64xf32>
    %46 = arith.addf %39, %45 : vector<2x64x64xf32>
    %47 = arith.mulf %43, %43 : vector<2x64x64xf32>
    %48 = arith.mulf %46, %46 : vector<2x64x64xf32>
    %49 = arith.addf %47, %48 : vector<2x64x64xf32>
    %50 = math.sqrt %49 : vector<2x64x64xf32>
    %c0_15 = arith.constant 0 : index
    %c0_16 = arith.constant 0 : index
    %c0_17 = arith.constant 0 : index
    %51 = vector.load %arg1[%c0_15, %c0_16, %c0_17] : memref<2x64x64xf32, #tpu.memory_space<vmem>>, vector<2x64x64xf32>
    %52 = vector.extract_strided_slice %51 {offsets = [0, 0, 0], sizes = [1, 64, 64], strides = [1, 1, 1]} : vector<2x64x64xf32> to vector<1x64x64xf32>
    %53 = vector.shape_cast %52 : vector<1x64x64xf32> to vector<64x64xf32>
    %54 = vector.extract_strided_slice %51 {offsets = [1, 0, 0], sizes = [1, 64, 64], strides = [1, 1, 1]} : vector<2x64x64xf32> to vector<1x64x64xf32>
    %55 = vector.shape_cast %54 : vector<1x64x64xf32> to vector<64x64xf32>
    %56 = vector.extract_strided_slice %50 {offsets = [0, 0, 0], sizes = [1, 64, 64], strides = [1, 1, 1]} : vector<2x64x64xf32> to vector<1x64x64xf32>
    %57 = vector.shape_cast %56 : vector<1x64x64xf32> to vector<64x64xf32>
    %58 = vector.extract_strided_slice %50 {offsets = [1, 0, 0], sizes = [1, 64, 64], strides = [1, 1, 1]} : vector<2x64x64xf32> to vector<1x64x64xf32>
    %59 = vector.shape_cast %58 : vector<1x64x64xf32> to vector<64x64xf32>
    %cst_18 = arith.constant 2.000000e+00 : f32
    %60 = vector.broadcast %cst_18 : f32 to vector<64x64xf32>
    %61 = arith.mulf %60, %53 : vector<64x64xf32>
    %62 = arith.mulf %61, %55 : vector<64x64xf32>
    %cst_19 = arith.constant 4.000000e-01 : f32
    %63 = vector.broadcast %cst_19 : f32 to vector<64x64xf32>
    %64 = arith.addf %62, %63 : vector<64x64xf32>
    %65 = arith.mulf %53, %53 : vector<64x64xf32>
    %66 = arith.mulf %55, %55 : vector<64x64xf32>
    %67 = arith.addf %65, %66 : vector<64x64xf32>
    %cst_20 = arith.constant 4.000000e-01 : f32
    %68 = vector.broadcast %cst_20 : f32 to vector<64x64xf32>
    %69 = arith.addf %67, %68 : vector<64x64xf32>
    %70 = tpu.reciprocal %69 {approx = true} : vector<64x64xf32> -> vector<64x64xf32>
    %71 = arith.mulf %64, %70 : vector<64x64xf32>
    %cst_21 = arith.constant 2.000000e+00 : f32
    %72 = vector.broadcast %cst_21 : f32 to vector<64x64xf32>
    %73 = arith.mulf %72, %57 : vector<64x64xf32>
    %74 = arith.mulf %73, %59 : vector<64x64xf32>
    %cst_22 = arith.constant 2.250000e+02 : f32
    %75 = vector.broadcast %cst_22 : f32 to vector<64x64xf32>
    %76 = arith.addf %74, %75 : vector<64x64xf32>
    %77 = arith.mulf %57, %57 : vector<64x64xf32>
    %78 = arith.mulf %59, %59 : vector<64x64xf32>
    %79 = arith.addf %77, %78 : vector<64x64xf32>
    %cst_23 = arith.constant 2.250000e+02 : f32
    %80 = vector.broadcast %cst_23 : f32 to vector<64x64xf32>
    %81 = arith.addf %79, %80 : vector<64x64xf32>
    %82 = tpu.reciprocal %81 {approx = true} : vector<64x64xf32> -> vector<64x64xf32>
    %83 = arith.mulf %76, %82 : vector<64x64xf32>
    %84 = arith.maximumf %53, %55 : vector<64x64xf32>
    %85 = math.sqrt %83 : vector<64x64xf32>
    %86 = arith.mulf %71, %85 : vector<64x64xf32>
    %87 = arith.mulf %86, %84 : vector<64x64xf32>
    %88 = vector.shape_cast %87 : vector<64x64xf32> to vector<1x64x64xf32>
    %cst_24 = arith.constant dense<0.000000e+00> : vector<1xf32>
    %89 = vector.multi_reduction <add>, %88, %cst_24 [1, 2] : vector<1x64x64xf32> to vector<1xf32>
    %90 = vector.shape_cast %89 : vector<1xf32> to vector<1x1x1xf32>
    %91 = vector.extract %90[0, 0, 0] : f32 from vector<1x1x1xf32>
    %c0_25 = arith.constant 0 : index
    %c0_26 = arith.constant 0 : index
    %92 = memref.load %arg2[%c0_25, %c0_26] : memref<1x1xf32, #tpu.memory_space<smem>>
    memref.store %91, %arg2[%c0_25, %c0_26] : memref<1x1xf32, #tpu.memory_space<smem>>
    %93 = vector.shape_cast %84 : vector<64x64xf32> to vector<1x64x64xf32>
    %cst_27 = arith.constant dense<0.000000e+00> : vector<1xf32>
    %94 = vector.multi_reduction <add>, %93, %cst_27 [1, 2] : vector<1x64x64xf32> to vector<1xf32>
    %95 = vector.shape_cast %94 : vector<1xf32> to vector<1x1x1xf32>
    %96 = vector.extract %95[0, 0, 0] : f32 from vector<1x1x1xf32>
    %c0_28 = arith.constant 0 : index
    %c0_29 = arith.constant 0 : index
    %97 = memref.load %arg3[%c0_28, %c0_29] : memref<1x1xf32, #tpu.memory_space<smem>>
    memref.store %96, %arg3[%c0_28, %c0_29] : memref<1x1xf32, #tpu.memory_space<smem>>
    return
  }
}

</mosaic_0001>

<llo_original>
// kernel: _lambda_.3
$region0: #{_lambda_.3}
  #allocation0 [shape = 'u32[]', space=smem, size = 0x4, offset = 0x4, fixed_abs, tag = 'smem constant byte address 0x4 - core index']
  #allocation1 [shape = 'u32[144,128]{1,0:T(1,128)}', space=vmem, size = 0x12000, scoped, tag = 'internal scratch']
  %s0 = inlined_call_operand.vmem [shape: f32[2,18,18], index: 0, kind: input, shape index: {}]
  %s1 = inlined_call_operand.vmem [shape: f32[2,16,16], index: 1, kind: output, shape index: {}]
  %s2 = sld [smem:[#allocation0]]
  $region14: #{_lambda_.3} parent=0
    _
  %s4 = ssub.s32 1, %s2
  %s5 = scalar_select 0, %s4, %s2
  // Predicated region
  $region2: #{_lambda_.3} parent=0 // pred_check
    _
  $region3: #{_lambda_.3} parent=0 // pred_check_branch
    %7 = sbr.rel (0) target = $region5
  $region4: #{_lambda_.3} parent=0 // pred_region
    _
  $region5: #{_lambda_.3} parent=0 // pred_fallthru
    _
  %v8 = vld [vmem:[%s0] sm:$0xff]
  %v9 = vld [vmem:[%s0 + $0x8] sm:$0xff]
  %v10 = vld [vmem:[%s0 + $0x10] sm:$0x3]
  %v11 = vld [vmem:[%s0 + $0x18] sm:$0xff]
  %v12 = vld [vmem:[%s0 + $0x20] sm:$0xff]
  %v13 = vld [vmem:[%s0 + $0x28] sm:$0x3]
  %v14 = vadd.f32 %v8, 0.0
  %v15 = vadd.f32 %v9, 0.0
  %v16 = vadd.f32 %v11, 0.0
  %v17 = vadd.f32 %v12, 0.0
  %22 = vrot.lane.b32.xlu0 %v8, 127
  %v23 = vpop.permute.xlu0 %22
  %24 = vrot.lane.b32.xlu0 %v9, 127
  %v25 = vpop.permute.xlu0 %24
  %26 = vrot.lane.b32.xlu0 %v11, 127
  %v27 = vpop.permute.xlu0 %26
  %28 = vrot.lane.b32.xlu0 %v12, 127
  %v29 = vpop.permute.xlu0 %28
  %v34 = vadd.f32 %v14, %v23
  %v35 = vadd.f32 %v15, %v25
  %v36 = vadd.f32 %v16, %v27
  %v37 = vadd.f32 %v17, %v29
  %38 = vrot.lane.b32.xlu0 %v8, 126
  %v39 = vpop.permute.xlu0 %38
  %40 = vrot.lane.b32.xlu0 %v9, 126
  %v41 = vpop.permute.xlu0 %40
  %42 = vrot.lane.b32.xlu0 %v11, 126
  %v43 = vpop.permute.xlu0 %42
  %44 = vrot.lane.b32.xlu0 %v12, 126
  %v45 = vpop.permute.xlu0 %44
  %v50 = vadd.f32 %v34, %v39
  %v51 = vadd.f32 %v35, %v41
  %v52 = vadd.f32 %v36, %v43
  %v53 = vadd.f32 %v37, %v45
  %vm56 = vcmask 1046528
  %v57 = vrot.slane %v8, 1
  %v58 = vrot.slane %v9, 1
  %v59 = vsel %vm56, %v57, %v58
  %v60 = vrot.slane %v10, 1
  %v61 = vsel %vm56, %v58, %v60
  %v62 = vrot.slane %v11, 1
  %v63 = vrot.slane %v12, 1
  %v64 = vsel %vm56, %v62, %v63
  %v65 = vrot.slane %v13, 1
  %v66 = vsel %vm56, %v63, %v65
  %v71 = vadd.f32 %v50, %v59
  %v72 = vadd.f32 %v51, %v61
  %v73 = vadd.f32 %v52, %v64
  %v74 = vadd.f32 %v53, %v66
  %75 = vrot.lane.b32.xlu0 %v59, 127
  %v76 = vpop.permute.xlu0 %75
  %77 = vrot.lane.b32.xlu0 %v61, 127
  %v78 = vpop.permute.xlu0 %77
  %79 = vrot.lane.b32.xlu0 %v64, 127
  %v80 = vpop.permute.xlu0 %79
  %81 = vrot.lane.b32.xlu0 %v66, 127
  %v82 = vpop.permute.xlu0 %81
  %v87 = vadd.f32 %v71, %v76
  %v88 = vadd.f32 %v72, %v78
  %v89 = vadd.f32 %v73, %v80
  %v90 = vadd.f32 %v74, %v82
  %91 = vrot.lane.b32.xlu0 %v59, 126
  %v92 = vpop.permute.xlu0 %91
  %93 = vrot.lane.b32.xlu0 %v61, 126
  %v94 = vpop.permute.xlu0 %93
  %95 = vrot.lane.b32.xlu0 %v64, 126
  %v96 = vpop.permute.xlu0 %95
  %97 = vrot.lane.b32.xlu0 %v66, 126
  %v98 = vpop.permute.xlu0 %97
  %v103 = vadd.f32 %v87, %v92
  %v104 = vadd.f32 %v88, %v94
  %v105 = vadd.f32 %v89, %v96
  %v106 = vadd.f32 %v90, %v98
  %vm107 = vcmask 1045504
  %v108 = vrot.slane %v8, 2
  %v109 = vrot.slane %v9, 2
  %v110 = vsel %vm107, %v108, %v109
  %v111 = vrot.slane %v10, 2
  %v112 = vsel %vm107, %v109, %v111
  %v113 = vrot.slane %v11, 2
  %v114 = vrot.slane %v12, 2
  %v115 = vsel %vm107, %v113, %v114
  %v116 = vrot.slane %v13, 2
  %v117 = vsel %vm107, %v114, %v116
  %v122 = vadd.f32 %v103, %v110
  %v123 = vadd.f32 %v104, %v112
  %v124 = vadd.f32 %v105, %v115
  %v125 = vadd.f32 %v106, %v117
  %126 = vrot.lane.b32.xlu0 %v110, 127
  %v127 = vpop.permute.xlu0 %126
  %128 = vrot.lane.b32.xlu0 %v112, 127
  %v129 = vpop.permute.xlu0 %128
  %130 = vrot.lane.b32.xlu0 %v115, 127
  %v131 = vpop.permute.xlu0 %130
  %132 = vrot.lane.b32.xlu0 %v117, 127
  %v133 = vpop.permute.xlu0 %132
  %v138 = vadd.f32 %v122, %v127
  %v139 = vadd.f32 %v123, %v129
  %v140 = vadd.f32 %v124, %v131
  %v141 = vadd.f32 %v125, %v133
  %142 = vrot.lane.b32.xlu0 %v110, 126
  %v143 = vpop.permute.xlu0 %142
  %144 = vrot.lane.b32.xlu0 %v112, 126
  %v145 = vpop.permute.xlu0 %144
  %146 = vrot.lane.b32.xlu0 %v115, 126
  %v147 = vpop.permute.xlu0 %146
  %148 = vrot.lane.b32.xlu0 %v117, 126
  %v149 = vpop.permute.xlu0 %148
  %v154 = vadd.f32 %v138, %v143
  %v155 = vadd.f32 %v139, %v145
  %v156 = vadd.f32 %v140, %v147
  %v157 = vadd.f32 %v141, %v149
  %v158 = vmul.f32 %v154, 0.11111111
  %v159 = vmul.f32 %v155, 0.11111111
  %v160 = vmul.f32 %v156, 0.11111111
  %v161 = vmul.f32 %v157, 0.11111111
  %vm166 = vcmask 1040384
  %v167 = vrot.slane %v158, 7
  %v168 = vrot.slane %v159, 7
  %v169 = vsel %vm166, %v167, %v168
  %v170 = vrot.slane %v160, 7
  %v171 = vrot.slane %v161, 7
  %v172 = vsel %vm166, %v170, %v171
  %173 = vrot.lane.b32.xlu0 %v167, 1
  %v174 = vpop.permute.xlu0 %173
  %175 = vrot.lane.b32.xlu0 %v169, 1
  %v176 = vpop.permute.xlu0 %175
  %177 = vrot.lane.b32.xlu0 %v168, 1
  %v178 = vpop.permute.xlu0 %177
  %179 = vrot.lane.b32.xlu0 %v170, 1
  %v180 = vpop.permute.xlu0 %179
  %181 = vrot.lane.b32.xlu0 %v172, 1
  %v182 = vpop.permute.xlu0 %181
  %183 = vrot.lane.b32.xlu0 %v171, 1
  %v184 = vpop.permute.xlu0 %183
  %v191 = vsub.f32 %v8, %v174
  %v192 = vsub.f32 %v9, %v176
  %v193 = vsub.f32 %v10, %v178
  %v194 = vsub.f32 %v11, %v180
  %v195 = vsub.f32 %v12, %v182
  %v196 = vsub.f32 %v13, %v184
  %203 = vrot.lane.b32.xlu0 %v191, 127
  %v204 = vpop.permute.xlu0 %203
  %205 = vrot.lane.b32.xlu0 %v192, 127
  %v206 = vpop.permute.xlu0 %205
  %207 = vrot.lane.b32.xlu0 %v193, 127
  %v208 = vpop.permute.xlu0 %207
  %209 = vrot.lane.b32.xlu0 %v194, 127
  %v210 = vpop.permute.xlu0 %209
  %211 = vrot.lane.b32.xlu0 %v195, 127
  %v212 = vpop.permute.xlu0 %211
  %213 = vrot.lane.b32.xlu0 %v196, 127
  %v214 = vpop.permute.xlu0 %213
  %vm221 = vcmask 130049
  %222 = vst.msk [vmem:[%s1 - $0x1] sm:$0xfe] %vm221, %v204
  %vm223 = vcmask 130048
  %224 = vst.msk [vmem:[%s1 + $0x7] sm:$0xff] %vm223, %v206
  %vm225 = vcmask 122880
  %226 = vst.msk [vmem:[%s1 + $0xf] sm:$0x1] %vm225, %v208
  %227 = vst.msk [vmem:[%s1 + $0xf] sm:$0xfe] %vm221, %v210
  %228 = vst.msk [vmem:[%s1 + $0x17] sm:$0xff] %vm223, %v212
  %229 = vst.msk [vmem:[%s1 + $0x1f] sm:$0x1] %vm225, %v214
  // Predicated region
  $region6: #{_lambda_.3} parent=0 // pred_check
    _
  $region7: #{_lambda_.3} parent=0 // pred_check_branch
    %231 = sbr.rel (0) target = $region9
  $region8: #{_lambda_.3} parent=0 // pred_region
    _
  $region9: #{_lambda_.3} parent=0 // pred_fallthru
    _
  // Predicated region
  $region10: #{_lambda_.3} parent=0 // pred_check
    _
  $region11: #{_lambda_.3} parent=0 // pred_check_branch
    %233 = sbr.rel (0) target = $region13
  $region12: #{_lambda_.3} parent=0 // pred_region
    _
  $region13: #{_lambda_.3} parent=0 // pred_fallthru
    _

// kernel: _lambda_.4
$region0: #{_lambda_.4}
  #allocation0 [shape = 'u32[]', space=smem, size = 0x4, offset = 0x4, fixed_abs, tag = 'smem constant byte address 0x4 - core index']
  #allocation1 [shape = 'u32[144,128]{1,0:T(1,128)}', space=vmem, size = 0x12000, scoped, tag = 'internal scratch']
  %s0 = inlined_call_operand.vmem [shape: f32[2,24,24], index: 0, kind: input, shape index: {}]
  %s1 = inlined_call_operand.vmem [shape: f32[2,16,16], index: 1, kind: output, shape index: {}]
  %s2 = sld [smem:[#allocation0]]
  $region14: #{_lambda_.4} parent=0
    _
  %s4 = ssub.s32 1, %s2
  %s5 = scalar_select 0, %s4, %s2
  // Predicated region
  $region2: #{_lambda_.4} parent=0 // pred_check
    _
  $region3: #{_lambda_.4} parent=0 // pred_check_branch
    %7 = sbr.rel (0) target = $region5
  $region4: #{_lambda_.4} parent=0 // pred_region
    _
  $region5: #{_lambda_.4} parent=0 // pred_fallthru
    _
  %v8 = vld [vmem:[%s0] sm:$0xff]
  %v9 = vld [vmem:[%s0 + $0x8] sm:$0xff]
  %v10 = vld [vmem:[%s0 + $0x10] sm:$0xff]
  %v11 = vld [vmem:[%s0 + $0x18] sm:$0xff]
  %v12 = vld [vmem:[%s0 + $0x20] sm:$0xff]
  %v13 = vld [vmem:[%s0 + $0x28] sm:$0xff]
  %v14 = vmul.f32 %v8, 0.07885757
  %v15 = vmul.f32 %v9, 0.07885757
  %v16 = vmul.f32 %v11, 0.07885757
  %v17 = vmul.f32 %v12, 0.07885757
  %v18 = vmul.f32 %v8, 0.10048672
  %v19 = vmul.f32 %v9, 0.10048672
  %v20 = vmul.f32 %v10, 0.10048672
  %v21 = vmul.f32 %v11, 0.10048672
  %v22 = vmul.f32 %v12, 0.10048672
  %v23 = vmul.f32 %v13, 0.10048672
  %vm30 = vcmask 1046528
  %v31 = vrot.slane %v18, 1
  %v32 = vrot.slane %v19, 1
  %v33 = vsel %vm30, %v31, %v32
  %v34 = vrot.slane %v20, 1
  %v35 = vsel %vm30, %v32, %v34
  %v36 = vrot.slane %v21, 1
  %v37 = vrot.slane %v22, 1
  %v38 = vsel %vm30, %v36, %v37
  %v39 = vrot.slane %v23, 1
  %v40 = vsel %vm30, %v37, %v39
  %v45 = vadd.f32 %v14, %v33
  %v46 = vadd.f32 %v15, %v35
  %v47 = vadd.f32 %v16, %v38
  %v48 = vadd.f32 %v17, %v40
  %v49 = vmul.f32 %v8, 0.11948081
  %v50 = vmul.f32 %v9, 0.11948081
  %v51 = vmul.f32 %v10, 0.11948081
  %v52 = vmul.f32 %v11, 0.11948081
  %v53 = vmul.f32 %v12, 0.11948081
  %v54 = vmul.f32 %v13, 0.11948081
  %vm61 = vcmask 1045504
  %v62 = vrot.slane %v49, 2
  %v63 = vrot.slane %v50, 2
  %v64 = vsel %vm61, %v62, %v63
  %v65 = vrot.slane %v51, 2
  %v66 = vsel %vm61, %v63, %v65
  %v67 = vrot.slane %v52, 2
  %v68 = vrot.slane %v53, 2
  %v69 = vsel %vm61, %v67, %v68
  %v70 = vrot.slane %v54, 2
  %v71 = vsel %vm61, %v68, %v70
  %v76 = vadd.f32 %v45, %v64
  %v77 = vadd.f32 %v46, %v66
  %v78 = vadd.f32 %v47, %v69
  %v79 = vadd.f32 %v48, %v71
  %v80 = vmul.f32 %v8, 0.1325598
  %v81 = vmul.f32 %v9, 0.1325598
  %v82 = vmul.f32 %v10, 0.1325598
  %v83 = vmul.f32 %v11, 0.1325598
  %v84 = vmul.f32 %v12, 0.1325598
  %v85 = vmul.f32 %v13, 0.1325598
  %vm92 = vcmask 1044480
  %v93 = vrot.slane %v80, 3
  %v94 = vrot.slane %v81, 3
  %v95 = vsel %vm92, %v93, %v94
  %v96 = vrot.slane %v82, 3
  %v97 = vsel %vm92, %v94, %v96
  %v98 = vrot.slane %v83, 3
  %v99 = vrot.slane %v84, 3
  %v100 = vsel %vm92, %v98, %v99
  %v101 = vrot.slane %v85, 3
  %v102 = vsel %vm92, %v99, %v101
  %v107 = vadd.f32 %v76, %v95
  %v108 = vadd.f32 %v77, %v97
  %v109 = vadd.f32 %v78, %v100
  %v110 = vadd.f32 %v79, %v102
  %v111 = vmul.f32 %v8, 0.13723022
  %v112 = vmul.f32 %v9, 0.13723022
  %v113 = vmul.f32 %v10, 0.13723022
  %v114 = vmul.f32 %v11, 0.13723022
  %v115 = vmul.f32 %v12, 0.13723022
  %v116 = vmul.f32 %v13, 0.13723022
  %vm123 = vcmask 1043456
  %v124 = vrot.slane %v111, 4
  %v125 = vrot.slane %v112, 4
  %v126 = vsel %vm123, %v124, %v125
  %v127 = vrot.slane %v113, 4
  %v128 = vsel %vm123, %v125, %v127
  %v129 = vrot.slane %v114, 4
  %v130 = vrot.slane %v115, 4
  %v131 = vsel %vm123, %v129, %v130
  %v132 = vrot.slane %v116, 4
  %v133 = vsel %vm123, %v130, %v132
  %v138 = vadd.f32 %v107, %v126
  %v139 = vadd.f32 %v108, %v128
  %v140 = vadd.f32 %v109, %v131
  %v141 = vadd.f32 %v110, %v133
  %vm142 = vcmask 1042432
  %v143 = vrot.slane %v80, 5
  %v144 = vrot.slane %v81, 5
  %v145 = vsel %vm142, %v143, %v144
  %v146 = vrot.slane %v82, 5
  %v147 = vsel %vm142, %v144, %v146
  %v148 = vrot.slane %v83, 5
  %v149 = vrot.slane %v84, 5
  %v150 = vsel %vm142, %v148, %v149
  %v151 = vrot.slane %v85, 5
  %v152 = vsel %vm142, %v149, %v151
  %v157 = vadd.f32 %v138, %v145
  %v158 = vadd.f32 %v139, %v147
  %v159 = vadd.f32 %v140, %v150
  %v160 = vadd.f32 %v141, %v152
  %vm161 = vcmask 1041408
  %v162 = vrot.slane %v49, 6
  %v163 = vrot.slane %v50, 6
  %v164 = vsel %vm161, %v162, %v163
  %v165 = vrot.slane %v51, 6
  %v166 = vsel %vm161, %v163, %v165
  %v167 = vrot.slane %v52, 6
  %v168 = vrot.slane %v53, 6
  %v169 = vsel %vm161, %v167, %v168
  %v170 = vrot.slane %v54, 6
  %v171 = vsel %vm161, %v168, %v170
  %v176 = vadd.f32 %v157, %v164
  %v177 = vadd.f32 %v158, %v166
  %v178 = vadd.f32 %v159, %v169
  %v179 = vadd.f32 %v160, %v171
  %vm180 = vcmask 1040384
  %v181 = vrot.slane %v18, 7
  %v182 = vrot.slane %v19, 7
  %v183 = vsel %vm180, %v181, %v182
  %v184 = vrot.slane %v20, 7
  %v185 = vsel %vm180, %v182, %v184
  %v186 = vrot.slane %v21, 7
  %v187 = vrot.slane %v22, 7
  %v188 = vsel %vm180, %v186, %v187
  %v189 = vrot.slane %v23, 7
  %v190 = vsel %vm180, %v187, %v189
  %v195 = vadd.f32 %v176, %v183
  %v196 = vadd.f32 %v177, %v185
  %v197 = vadd.f32 %v178, %v188
  %v198 = vadd.f32 %v179, %v190
  %v199 = vmul.f32 %v10, 0.07885757
  %v200 = vmul.f32 %v13, 0.07885757
  %v201 = vadd.f32 %v195, %v15
  %v202 = vadd.f32 %v196, %v199
  %v203 = vadd.f32 %v197, %v17
  %v204 = vadd.f32 %v198, %v200
  %v205 = vmul.f32 %v201, 0.07885757
  %v206 = vmul.f32 %v202, 0.07885757
  %v207 = vmul.f32 %v203, 0.07885757
  %v208 = vmul.f32 %v204, 0.07885757
  %v209 = vmul.f32 %v201, 0.10048672
  %v210 = vmul.f32 %v202, 0.10048672
  %v211 = vmul.f32 %v203, 0.10048672
  %v212 = vmul.f32 %v204, 0.10048672
  %217 = vrot.lane.b32.xlu0 %v209, 127
  %v218 = vpop.permute.xlu0 %217
  %219 = vrot.lane.b32.xlu0 %v210, 127
  %v220 = vpop.permute.xlu0 %219
  %221 = vrot.lane.b32.xlu0 %v211, 127
  %v222 = vpop.permute.xlu0 %221
  %223 = vrot.lane.b32.xlu0 %v212, 127
  %v224 = vpop.permute.xlu0 %223
  %v229 = vadd.f32 %v205, %v218
  %v230 = vadd.f32 %v206, %v220
  %v231 = vadd.f32 %v207, %v222
  %v232 = vadd.f32 %v208, %v224
  %v233 = vmul.f32 %v201, 0.11948081
  %v234 = vmul.f32 %v202, 0.11948081
  %v235 = vmul.f32 %v203, 0.11948081
  %v236 = vmul.f32 %v204, 0.11948081
  %241 = vrot.lane.b32.xlu0 %v233, 126
  %v242 = vpop.permute.xlu0 %241
  %243 = vrot.lane.b32.xlu0 %v234, 126
  %v244 = vpop.permute.xlu0 %243
  %245 = vrot.lane.b32.xlu0 %v235, 126
  %v246 = vpop.permute.xlu0 %245
  %247 = vrot.lane.b32.xlu0 %v236, 126
  %v248 = vpop.permute.xlu0 %247
  %v253 = vadd.f32 %v229, %v242
  %v254 = vadd.f32 %v230, %v244
  %v255 = vadd.f32 %v231, %v246
  %v256 = vadd.f32 %v232, %v248
  %v257 = vmul.f32 %v201, 0.1325598
  %v258 = vmul.f32 %v202, 0.1325598
  %v259 = vmul.f32 %v203, 0.1325598
  %v260 = vmul.f32 %v204, 0.1325598
  %265 = vrot.lane.b32.xlu0 %v257, 125
  %v266 = vpop.permute.xlu0 %265
  %267 = vrot.lane.b32.xlu0 %v258, 125
  %v268 = vpop.permute.xlu0 %267
  %269 = vrot.lane.b32.xlu0 %v259, 125
  %v270 = vpop.permute.xlu0 %269
  %271 = vrot.lane.b32.xlu0 %v260, 125
  %v272 = vpop.permute.xlu0 %271
  %v277 = vadd.f32 %v253, %v266
  %v278 = vadd.f32 %v254, %v268
  %v279 = vadd.f32 %v255, %v270
  %v280 = vadd.f32 %v256, %v272
  %v281 = vmul.f32 %v201, 0.13723022
  %v282 = vmul.f32 %v202, 0.13723022
  %v283 = vmul.f32 %v203, 0.13723022
  %v284 = vmul.f32 %v204, 0.13723022
  %289 = vrot.lane.b32.xlu0 %v281, 124
  %v290 = vpop.permute.xlu0 %289
  %291 = vrot.lane.b32.xlu0 %v282, 124
  %v292 = vpop.permute.xlu0 %291
  %293 = vrot.lane.b32.xlu0 %v283, 124
  %v294 = vpop.permute.xlu0 %293
  %295 = vrot.lane.b32.xlu0 %v284, 124
  %v296 = vpop.permute.xlu0 %295
  %v301 = vadd.f32 %v277, %v290
  %v302 = vadd.f32 %v278, %v292
  %v303 = vadd.f32 %v279, %v294
  %v304 = vadd.f32 %v280, %v296
  %305 = vrot.lane.b32.xlu0 %v257, 123
  %v306 = vpop.permute.xlu0 %305
  %307 = vrot.lane.b32.xlu0 %v258, 123
  %v308 = vpop.permute.xlu0 %307
  %309 = vrot.lane.b32.xlu0 %v259, 123
  %v310 = vpop.permute.xlu0 %309
  %311 = vrot.lane.b32.xlu0 %v260, 123
  %v312 = vpop.permute.xlu0 %311
  %v317 = vadd.f32 %v301, %v306
  %v318 = vadd.f32 %v302, %v308
  %v319 = vadd.f32 %v303, %v310
  %v320 = vadd.f32 %v304, %v312
  %321 = vrot.lane.b32.xlu0 %v233, 122
  %v322 = vpop.permute.xlu0 %321
  %323 = vrot.lane.b32.xlu0 %v234, 122
  %v324 = vpop.permute.xlu0 %323
  %325 = vrot.lane.b32.xlu0 %v235, 122
  %v326 = vpop.permute.xlu0 %325
  %327 = vrot.lane.b32.xlu0 %v236, 122
  %v328 = vpop.permute.xlu0 %327
  %v333 = vadd.f32 %v317, %v322
  %v334 = vadd.f32 %v318, %v324
  %v335 = vadd.f32 %v319, %v326
  %v336 = vadd.f32 %v320, %v328
  %337 = vrot.lane.b32.xlu0 %v209, 121
  %v338 = vpop.permute.xlu0 %337
  %339 = vrot.lane.b32.xlu0 %v210, 121
  %v340 = vpop.permute.xlu0 %339
  %341 = vrot.lane.b32.xlu0 %v211, 121
  %v342 = vpop.permute.xlu0 %341
  %343 = vrot.lane.b32.xlu0 %v212, 121
  %v344 = vpop.permute.xlu0 %343
  %v349 = vadd.f32 %v333, %v338
  %v350 = vadd.f32 %v334, %v340
  %v351 = vadd.f32 %v335, %v342
  %v352 = vadd.f32 %v336, %v344
  %357 = vrot.lane.b32.xlu0 %v205, 120
  %v358 = vpop.permute.xlu0 %357
  %359 = vrot.lane.b32.xlu0 %v206, 120
  %v360 = vpop.permute.xlu0 %359
  %361 = vrot.lane.b32.xlu0 %v207, 120
  %v362 = vpop.permute.xlu0 %361
  %363 = vrot.lane.b32.xlu0 %v208, 120
  %v364 = vpop.permute.xlu0 %363
  %v369 = vadd.f32 %v349, %v358
  %v370 = vadd.f32 %v350, %v360
  %v371 = vadd.f32 %v351, %v362
  %v372 = vadd.f32 %v352, %v364
  %v373 = vmul.f32 %v369, %v369
  %v374 = vmul.f32 %v370, %v370
  %v375 = vmul.f32 %v371, %v371
  %v376 = vmul.f32 %v372, %v372
  %vm377 = vcmask 130048
  %v378 = vsel %vm377, %v373, 0.0
  %379 = vadd.xlane.f32.xlu0 %v378
  %v380 = vpop.xlane.xlu0 %379
  %v381 = vsel %vm377, %v374, 0.0
  %382 = vadd.xlane.f32.xlu0 %v381
  %v383 = vpop.xlane.xlu0 %382
  %v384 = vsel %vm377, %v375, 0.0
  %385 = vadd.xlane.f32.xlu0 %v384
  %v386 = vpop.xlane.xlu0 %385
  %v387 = vsel %vm377, %v376, 0.0
  %388 = vadd.xlane.f32.xlu0 %v387
  %v389 = vpop.xlane.xlu0 %388
  %v390 = vrsqrt.pop %v380
  %v391 = vmul.f32 %v380, %v390
  %vm392 = vcmp.eq.f32.partialorder %v380, inf
  %v393 = vsel %vm392, %v380, %v391
  %vm394 = vcmp.eq.f32.partialorder %v380, 0.0
  %v395 = vand.u32 %v380, 2147483648
  %v396 = vsel %vm394, %v395, %v393
  %v397 = vrsqrt.pop %v383
  %v398 = vmul.f32 %v383, %v397
  %vm399 = vcmp.eq.f32.partialorder %v383, inf
  %v400 = vsel %vm399, %v383, %v398
  %vm401 = vcmp.eq.f32.partialorder %v383, 0.0
  %v402 = vand.u32 %v383, 2147483648
  %v403 = vsel %vm401, %v402, %v400
  %v404 = vrsqrt.pop %v386
  %v405 = vmul.f32 %v386, %v404
  %vm406 = vcmp.eq.f32.partialorder %v386, inf
  %v407 = vsel %vm406, %v386, %v405
  %vm408 = vcmp.eq.f32.partialorder %v386, 0.0
  %v409 = vand.u32 %v386, 2147483648
  %v410 = vsel %vm408, %v409, %v407
  %v411 = vrsqrt.pop %v389
  %v412 = vmul.f32 %v389, %v411
  %vm413 = vcmp.eq.f32.partialorder %v389, inf
  %v414 = vsel %vm413, %v389, %v412
  %vm415 = vcmp.eq.f32.partialorder %v389, 0.0
  %v416 = vand.u32 %v389, 2147483648
  %v417 = vsel %vm415, %v416, %v414
  %v418 = vmax.f32 %v396, 1e-12
  %v419 = vmax.f32 %v403, 1e-12
  %v420 = vmax.f32 %v410, 1e-12
  %v421 = vmax.f32 %v417, 1e-12
  %v422 = vrcp.pop %v418
  %v423 = vmul.f32 %v369, %v422
  %v424 = vrcp.pop %v419
  %v425 = vmul.f32 %v370, %v424
  %v426 = vrcp.pop %v420
  %v427 = vmul.f32 %v371, %v426
  %v428 = vrcp.pop %v421
  %v429 = vmul.f32 %v372, %v428
  %430 = vst.msk [vmem:[%s1] sm:$0xff] %vm377, %v423
  %431 = vst.msk [vmem:[%s1 + $0x8] sm:$0xff] %vm377, %v425
  %432 = vst.msk [vmem:[%s1 + $0x10] sm:$0xff] %vm377, %v427
  %433 = vst.msk [vmem:[%s1 + $0x18] sm:$0xff] %vm377, %v429
  // Predicated region
  $region6: #{_lambda_.4} parent=0 // pred_check
    _
  $region7: #{_lambda_.4} parent=0 // pred_check_branch
    %435 = sbr.rel (0) target = $region9
  $region8: #{_lambda_.4} parent=0 // pred_region
    _
  $region9: #{_lambda_.4} parent=0 // pred_fallthru
    _
  // Predicated region
  $region10: #{_lambda_.4} parent=0 // pred_check
    _
  $region11: #{_lambda_.4} parent=0 // pred_check_branch
    %437 = sbr.rel (0) target = $region13
  $region12: #{_lambda_.4} parent=0 // pred_region
    _
  $region13: #{_lambda_.4} parent=0 // pred_fallthru
    _

// kernel: _lambda_.5
$region0: #{_lambda_.5}
  #allocation0 [shape = 'u32[]', space=smem, size = 0x4, offset = 0x4, fixed_abs, tag = 'smem constant byte address 0x4 - core index']
  #allocation1 [shape = 'u32[144,128]{1,0:T(1,128)}', space=vmem, size = 0x12000, scoped, tag = 'internal scratch']
  %s0 = inlined_call_operand.vmem [shape: f32[2,66,66], index: 0, kind: input, shape index: {}]
  %s1 = inlined_call_operand.vmem [shape: f32[2,64,64], index: 1, kind: input, shape index: {}]
  %s2 = inlined_call_operand.hbm [shape: f32[1,1], index: 2, kind: output, shape index: {0}]
  %s3 = inlined_call_operand.hbm [shape: f32[1,1], index: 3, kind: output, shape index: {1}]
  %4 = xla_tuple %s2, %s3
  %s5 = sld [smem:[#allocation0]]
  $region26: #{_lambda_.5} parent=0
    _
  %s7 = ssub.s32 1, %s5
  %s8 = scalar_select 0, %s7, %s5
  $region1: #{_lambda_.5} parent=0
    #allocation2 [shape = 'u8[512]{0}', space=smem, size = 0x200, scoped, tag = 'output window, operand 0, single buffered']
    #allocation3 [shape = 's32[1]{0}', space=sflag, size = 0x4, scoped, tag = 'scoped memory for _lambda_.5']
    #allocation4 [shape = 'u8[512]{0}', space=smem, size = 0x200, scoped, tag = 'output window, operand 1, single buffered']
    #allocation5 [shape = 's32[1]{0}', space=sflag, size = 0x4, scoped, tag = 'scoped memory for _lambda_.5']
    %9 = vsyncpa [#allocation3], 0
    %10 = vsyncpa [#allocation5], 0
    // Predicated region
    $region2: #{_lambda_.5} parent=1 // pred_check
      _
    $region3: #{_lambda_.5} parent=1 // pred_check_branch
      %12 = sbr.rel (0) target = $region5
    $region4: #{_lambda_.5} parent=1 // pred_region
      _
    $region5: #{_lambda_.5} parent=1 // pred_fallthru
      _
    // Predicated region
    $region6: #{_lambda_.5} parent=1 // pred_check
      _
    $region7: #{_lambda_.5} parent=1 // pred_check_branch
      %14 = sbr.rel (0) target = $region9
    $region8: #{_lambda_.5} parent=1 // pred_region
      _
    $region9: #{_lambda_.5} parent=1 // pred_fallthru
      _
    %v15 = vld [vmem:[%s0] sm:$0xff]
    %v16 = vld [vmem:[%s0 + $0x8] sm:$0xff]
    %v17 = vld [vmem:[%s0 + $0x10] sm:$0xff]
    %v18 = vld [vmem:[%s0 + $0x18] sm:$0xff]
    %v19 = vld [vmem:[%s0 + $0x20] sm:$0xff]
    %v20 = vld [vmem:[%s0 + $0x28] sm:$0xff]
    %v21 = vld [vmem:[%s0 + $0x30] sm:$0xff]
    %v22 = vld [vmem:[%s0 + $0x38] sm:$0xff]
    %v23 = vld [vmem:[%s0 + $0x40] sm:$0x3]
    %v24 = vld [vmem:[%s0 + $0x48] sm:$0xff]
    %v25 = vld [vmem:[%s0 + $0x50] sm:$0xff]
    %v26 = vld [vmem:[%s0 + $0x58] sm:$0xff]
    %v27 = vld [vmem:[%s0 + $0x60] sm:$0xff]
    %v28 = vld [vmem:[%s0 + $0x68] sm:$0xff]
    %v29 = vld [vmem:[%s0 + $0x70] sm:$0xff]
    %v30 = vld [vmem:[%s0 + $0x78] sm:$0xff]
    %v31 = vld [vmem:[%s0 + $0x80] sm:$0xff]
    %v32 = vld [vmem:[%s0 + $0x88] sm:$0x3]
    %v33 = vmul.f32 %v15, -0.1875
    %v34 = vmul.f32 %v16, -0.1875
    %v35 = vmul.f32 %v17, -0.1875
    %v36 = vmul.f32 %v18, -0.1875
    %v37 = vmul.f32 %v19, -0.1875
    %v38 = vmul.f32 %v20, -0.1875
    %v39 = vmul.f32 %v21, -0.1875
    %v40 = vmul.f32 %v22, -0.1875
    %v41 = vmul.f32 %v24, -0.1875
    %v42 = vmul.f32 %v25, -0.1875
    %v43 = vmul.f32 %v26, -0.1875
    %v44 = vmul.f32 %v27, -0.1875
    %v45 = vmul.f32 %v28, -0.1875
    %v46 = vmul.f32 %v29, -0.1875
    %v47 = vmul.f32 %v30, -0.1875
    %v48 = vmul.f32 %v31, -0.1875
    %v49 = vadd.f32 %v33, 0.0
    %v50 = vadd.f32 %v34, 0.0
    %v51 = vadd.f32 %v35, 0.0
    %v52 = vadd.f32 %v36, 0.0
    %v53 = vadd.f32 %v37, 0.0
    %v54 = vadd.f32 %v38, 0.0
    %v55 = vadd.f32 %v39, 0.0
    %v56 = vadd.f32 %v40, 0.0
    %v57 = vadd.f32 %v41, 0.0
    %v58 = vadd.f32 %v42, 0.0
    %v59 = vadd.f32 %v43, 0.0
    %v60 = vadd.f32 %v44, 0.0
    %v61 = vadd.f32 %v45, 0.0
    %v62 = vadd.f32 %v46, 0.0
    %v63 = vadd.f32 %v47, 0.0
    %v64 = vadd.f32 %v48, 0.0
    %v65 = vmul.f32 %v15, -0.625
    %v66 = vmul.f32 %v16, -0.625
    %v67 = vmul.f32 %v17, -0.625
    %v68 = vmul.f32 %v18, -0.625
    %v69 = vmul.f32 %v19, -0.625
    %v70 = vmul.f32 %v20, -0.625
    %v71 = vmul.f32 %v21, -0.625
    %v72 = vmul.f32 %v22, -0.625
    %v73 = vmul.f32 %v24, -0.625
    %v74 = vmul.f32 %v25, -0.625
    %v75 = vmul.f32 %v26, -0.625
    %v76 = vmul.f32 %v27, -0.625
    %v77 = vmul.f32 %v28, -0.625
    %v78 = vmul.f32 %v29, -0.625
    %v79 = vmul.f32 %v30, -0.625
    %v80 = vmul.f32 %v31, -0.625
    %97 = vrot.lane.b32.xlu0 %v65, 127
    %v98 = vpop.permute.xlu0 %97
    %99 = vrot.lane.b32.xlu0 %v66, 127
    %v100 = vpop.permute.xlu0 %99
    %101 = vrot.lane.b32.xlu0 %v67, 127
    %v102 = vpop.permute.xlu0 %101
    %103 = vrot.lane.b32.xlu0 %v68, 127
    %v104 = vpop.permute.xlu0 %103
    %105 = vrot.lane.b32.xlu0 %v69, 127
    %v106 = vpop.permute.xlu0 %105
    %107 = vrot.lane.b32.xlu0 %v70, 127
    %v108 = vpop.permute.xlu0 %107
    %109 = vrot.lane.b32.xlu0 %v71, 127
    %v110 = vpop.permute.xlu0 %109
    %111 = vrot.lane.b32.xlu0 %v72, 127
    %v112 = vpop.permute.xlu0 %111
    %113 = vrot.lane.b32.xlu0 %v73, 127
    %v114 = vpop.permute.xlu0 %113
    %115 = vrot.lane.b32.xlu0 %v74, 127
    %v116 = vpop.permute.xlu0 %115
    %117 = vrot.lane.b32.xlu0 %v75, 127
    %v118 = vpop.permute.xlu0 %117
    %119 = vrot.lane.b32.xlu0 %v76, 127
    %v120 = vpop.permute.xlu0 %119
    %121 = vrot.lane.b32.xlu0 %v77, 127
    %v122 = vpop.permute.xlu0 %121
    %123 = vrot.lane.b32.xlu0 %v78, 127
    %v124 = vpop.permute.xlu0 %123
    %125 = vrot.lane.b32.xlu0 %v79, 127
    %v126 = vpop.permute.xlu0 %125
    %127 = vrot.lane.b32.xlu0 %v80, 127
    %v128 = vpop.permute.xlu0 %127
    %v145 = vadd.f32 %v49, %v98
    %v146 = vadd.f32 %v50, %v100
    %v147 = vadd.f32 %v51, %v102
    %v148 = vadd.f32 %v52, %v104
    %v149 = vadd.f32 %v53, %v106
    %v150 = vadd.f32 %v54, %v108
    %v151 = vadd.f32 %v55, %v110
    %v152 = vadd.f32 %v56, %v112
    %v153 = vadd.f32 %v57, %v114
    %v154 = vadd.f32 %v58, %v116
    %v155 = vadd.f32 %v59, %v118
    %v156 = vadd.f32 %v60, %v120
    %v157 = vadd.f32 %v61, %v122
    %v158 = vadd.f32 %v62, %v124
    %v159 = vadd.f32 %v63, %v126
    %v160 = vadd.f32 %v64, %v128
    %v161 = vmul.f32 %v15, 0.1875
    %v162 = vmul.f32 %v16, 0.1875
    %v163 = vmul.f32 %v17, 0.1875
    %v164 = vmul.f32 %v18, 0.1875
    %v165 = vmul.f32 %v19, 0.1875
    %v166 = vmul.f32 %v20, 0.1875
    %v167 = vmul.f32 %v21, 0.1875
    %v168 = vmul.f32 %v22, 0.1875
    %v169 = vmul.f32 %v24, 0.1875
    %v170 = vmul.f32 %v25, 0.1875
    %v171 = vmul.f32 %v26, 0.1875
    %v172 = vmul.f32 %v27, 0.1875
    %v173 = vmul.f32 %v28, 0.1875
    %v174 = vmul.f32 %v29, 0.1875
    %v175 = vmul.f32 %v30, 0.1875
    %v176 = vmul.f32 %v31, 0.1875
    %193 = vrot.lane.b32.xlu0 %v161, 126
    %v194 = vpop.permute.xlu0 %193
    %195 = vrot.lane.b32.xlu0 %v162, 126
    %v196 = vpop.permute.xlu0 %195
    %197 = vrot.lane.b32.xlu0 %v163, 126
    %v198 = vpop.permute.xlu0 %197
    %199 = vrot.lane.b32.xlu0 %v164, 126
    %v200 = vpop.permute.xlu0 %199
    %201 = vrot.lane.b32.xlu0 %v165, 126
    %v202 = vpop.permute.xlu0 %201
    %203 = vrot.lane.b32.xlu0 %v166, 126
    %v204 = vpop.permute.xlu0 %203
    %205 = vrot.lane.b32.xlu0 %v167, 126
    %v206 = vpop.permute.xlu0 %205
    %207 = vrot.lane.b32.xlu0 %v168, 126
    %v208 = vpop.permute.xlu0 %207
    %209 = vrot.lane.b32.xlu0 %v169, 126
    %v210 = vpop.permute.xlu0 %209
    %211 = vrot.lane.b32.xlu0 %v170, 126
    %v212 = vpop.permute.xlu0 %211
    %213 = vrot.lane.b32.xlu0 %v171, 126
    %v214 = vpop.permute.xlu0 %213
    %215 = vrot.lane.b32.xlu0 %v172, 126
    %v216 = vpop.permute.xlu0 %215
    %217 = vrot.lane.b32.xlu0 %v173, 126
    %v218 = vpop.permute.xlu0 %217
    %219 = vrot.lane.b32.xlu0 %v174, 126
    %v220 = vpop.permute.xlu0 %219
    %221 = vrot.lane.b32.xlu0 %v175, 126
    %v222 = vpop.permute.xlu0 %221
    %223 = vrot.lane.b32.xlu0 %v176, 126
    %v224 = vpop.permute.xlu0 %223
    %v241 = vadd.f32 %v49, %v194
    %v242 = vadd.f32 %v50, %v196
    %v243 = vadd.f32 %v51, %v198
    %v244 = vadd.f32 %v52, %v200
    %v245 = vadd.f32 %v53, %v202
    %v246 = vadd.f32 %v54, %v204
    %v247 = vadd.f32 %v55, %v206
    %v248 = vadd.f32 %v56, %v208
    %v249 = vadd.f32 %v57, %v210
    %v250 = vadd.f32 %v58, %v212
    %v251 = vadd.f32 %v59, %v214
    %v252 = vadd.f32 %v60, %v216
    %v253 = vadd.f32 %v61, %v218
    %v254 = vadd.f32 %v62, %v220
    %v255 = vadd.f32 %v63, %v222
    %v256 = vadd.f32 %v64, %v224
    %273 = vrot.lane.b32.xlu0 %v33, 126
    %v274 = vpop.permute.xlu0 %273
    %275 = vrot.lane.b32.xlu0 %v34, 126
    %v276 = vpop.permute.xlu0 %275
    %277 = vrot.lane.b32.xlu0 %v35, 126
    %v278 = vpop.permute.xlu0 %277
    %279 = vrot.lane.b32.xlu0 %v36, 126
    %v280 = vpop.permute.xlu0 %279
    %281 = vrot.lane.b32.xlu0 %v37, 126
    %v282 = vpop.permute.xlu0 %281
    %283 = vrot.lane.b32.xlu0 %v38, 126
    %v284 = vpop.permute.xlu0 %283
    %285 = vrot.lane.b32.xlu0 %v39, 126
    %v286 = vpop.permute.xlu0 %285
    %287 = vrot.lane.b32.xlu0 %v40, 126
    %v288 = vpop.permute.xlu0 %287
    %289 = vrot.lane.b32.xlu0 %v41, 126
    %v290 = vpop.permute.xlu0 %289
    %291 = vrot.lane.b32.xlu0 %v42, 126
    %v292 = vpop.permute.xlu0 %291
    %293 = vrot.lane.b32.xlu0 %v43, 126
    %v294 = vpop.permute.xlu0 %293
    %295 = vrot.lane.b32.xlu0 %v44, 126
    %v296 = vpop.permute.xlu0 %295
    %297 = vrot.lane.b32.xlu0 %v45, 126
    %v298 = vpop.permute.xlu0 %297
    %299 = vrot.lane.b32.xlu0 %v46, 126
    %v300 = vpop.permute.xlu0 %299
    %301 = vrot.lane.b32.xlu0 %v47, 126
    %v302 = vpop.permute.xlu0 %301
    %303 = vrot.lane.b32.xlu0 %v48, 126
    %v304 = vpop.permute.xlu0 %303
    %v321 = vadd.f32 %v145, %v274
    %v322 = vadd.f32 %v146, %v276
    %v323 = vadd.f32 %v147, %v278
    %v324 = vadd.f32 %v148, %v280
    %v325 = vadd.f32 %v149, %v282
    %v326 = vadd.f32 %v150, %v284
    %v327 = vadd.f32 %v151, %v286
    %v328 = vadd.f32 %v152, %v288
    %v329 = vadd.f32 %v153, %v290
    %v330 = vadd.f32 %v154, %v292
    %v331 = vadd.f32 %v155, %v294
    %v332 = vadd.f32 %v156, %v296
    %v333 = vadd.f32 %v157, %v298
    %v334 = vadd.f32 %v158, %v300
    %v335 = vadd.f32 %v159, %v302
    %v336 = vadd.f32 %v160, %v304
    %v337 = vmul.f32 %v23, -0.625
    %v338 = vmul.f32 %v32, -0.625
    %vm341 = vcmask 1046528
    %v342 = vrot.slane %v65, 1
    %v343 = vrot.slane %v66, 1
    %v344 = vsel %vm341, %v342, %v343
    %v345 = vrot.slane %v67, 1
    %v346 = vsel %vm341, %v343, %v345
    %v347 = vrot.slane %v68, 1
    %v348 = vsel %vm341, %v345, %v347
    %v349 = vrot.slane %v69, 1
    %v350 = vsel %vm341, %v347, %v349
    %v351 = vrot.slane %v70, 1
    %v352 = vsel %vm341, %v349, %v351
    %v353 = vrot.slane %v71, 1
    %v354 = vsel %vm341, %v351, %v353
    %v355 = vrot.slane %v72, 1
    %v356 = vsel %vm341, %v353, %v355
    %v357 = vrot.slane %v337, 1
    %v358 = vsel %vm341, %v355, %v357
    %v359 = vrot.slane %v73, 1
    %v360 = vrot.slane %v74, 1
    %v361 = vsel %vm341, %v359, %v360
    %v362 = vrot.slane %v75, 1
    %v363 = vsel %vm341, %v360, %v362
    %v364 = vrot.slane %v76, 1
    %v365 = vsel %vm341, %v362, %v364
    %v366 = vrot.slane %v77, 1
    %v367 = vsel %vm341, %v364, %v366
    %v368 = vrot.slane %v78, 1
    %v369 = vsel %vm341, %v366, %v368
    %v370 = vrot.slane %v79, 1
    %v371 = vsel %vm341, %v368, %v370
    %v372 = vrot.slane %v80, 1
    %v373 = vsel %vm341, %v370, %v372
    %v374 = vrot.slane %v338, 1
    %v375 = vsel %vm341, %v372, %v374
    %v392 = vadd.f32 %v241, %v344
    %v393 = vadd.f32 %v242, %v346
    %v394 = vadd.f32 %v243, %v348
    %v395 = vadd.f32 %v244, %v350
    %v396 = vadd.f32 %v245, %v352
    %v397 = vadd.f32 %v246, %v354
    %v398 = vadd.f32 %v247, %v356
    %v399 = vadd.f32 %v248, %v358
    %v400 = vadd.f32 %v249, %v361
    %v401 = vadd.f32 %v250, %v363
    %v402 = vadd.f32 %v251, %v365
    %v403 = vadd.f32 %v252, %v367
    %v404 = vadd.f32 %v253, %v369
    %v405 = vadd.f32 %v254, %v371
    %v406 = vadd.f32 %v255, %v373
    %v407 = vadd.f32 %v256, %v375
    %v408 = vmul.f32 %v15, 0.625
    %v409 = vmul.f32 %v16, 0.625
    %v410 = vmul.f32 %v17, 0.625
    %v411 = vmul.f32 %v18, 0.625
    %v412 = vmul.f32 %v19, 0.625
    %v413 = vmul.f32 %v20, 0.625
    %v414 = vmul.f32 %v21, 0.625
    %v415 = vmul.f32 %v22, 0.625
    %v416 = vmul.f32 %v23, 0.625
    %v417 = vmul.f32 %v24, 0.625
    %v418 = vmul.f32 %v25, 0.625
    %v419 = vmul.f32 %v26, 0.625
    %v420 = vmul.f32 %v27, 0.625
    %v421 = vmul.f32 %v28, 0.625
    %v422 = vmul.f32 %v29, 0.625
    %v423 = vmul.f32 %v30, 0.625
    %v424 = vmul.f32 %v31, 0.625
    %v425 = vmul.f32 %v32, 0.625
    %v444 = vrot.slane %v408, 1
    %v445 = vrot.slane %v409, 1
    %v446 = vsel %vm341, %v444, %v445
    %v447 = vrot.slane %v410, 1
    %v448 = vsel %vm341, %v445, %v447
    %v449 = vrot.slane %v411, 1
    %v450 = vsel %vm341, %v447, %v449
    %v451 = vrot.slane %v412, 1
    %v452 = vsel %vm341, %v449, %v451
    %v453 = vrot.slane %v413, 1
    %v454 = vsel %vm341, %v451, %v453
    %v455 = vrot.slane %v414, 1
    %v456 = vsel %vm341, %v453, %v455
    %v457 = vrot.slane %v415, 1
    %v458 = vsel %vm341, %v455, %v457
    %v459 = vrot.slane %v416, 1
    %v460 = vsel %vm341, %v457, %v459
    %v461 = vrot.slane %v417, 1
    %v462 = vrot.slane %v418, 1
    %v463 = vsel %vm341, %v461, %v462
    %v464 = vrot.slane %v419, 1
    %v465 = vsel %vm341, %v462, %v464
    %v466 = vrot.slane %v420, 1
    %v467 = vsel %vm341, %v464, %v466
    %v468 = vrot.slane %v421, 1
    %v469 = vsel %vm341, %v466, %v468
    %v470 = vrot.slane %v422, 1
    %v471 = vsel %vm341, %v468, %v470
    %v472 = vrot.slane %v423, 1
    %v473 = vsel %vm341, %v470, %v472
    %v474 = vrot.slane %v424, 1
    %v475 = vsel %vm341, %v472, %v474
    %v476 = vrot.slane %v425, 1
    %v477 = vsel %vm341, %v474, %v476
    %478 = vrot.lane.b32.xlu0 %v446, 126
    %v479 = vpop.permute.xlu0 %478
    %480 = vrot.lane.b32.xlu0 %v448, 126
    %v481 = vpop.permute.xlu0 %480
    %482 = vrot.lane.b32.xlu0 %v450, 126
    %v483 = vpop.permute.xlu0 %482
    %484 = vrot.lane.b32.xlu0 %v452, 126
    %v485 = vpop.permute.xlu0 %484
    %486 = vrot.lane.b32.xlu0 %v454, 126
    %v487 = vpop.permute.xlu0 %486
    %488 = vrot.lane.b32.xlu0 %v456, 126
    %v489 = vpop.permute.xlu0 %488
    %490 = vrot.lane.b32.xlu0 %v458, 126
    %v491 = vpop.permute.xlu0 %490
    %492 = vrot.lane.b32.xlu0 %v460, 126
    %v493 = vpop.permute.xlu0 %492
    %494 = vrot.lane.b32.xlu0 %v463, 126
    %v495 = vpop.permute.xlu0 %494
    %496 = vrot.lane.b32.xlu0 %v465, 126
    %v497 = vpop.permute.xlu0 %496
    %498 = vrot.lane.b32.xlu0 %v467, 126
    %v499 = vpop.permute.xlu0 %498
    %500 = vrot.lane.b32.xlu0 %v469, 126
    %v501 = vpop.permute.xlu0 %500
    %502 = vrot.lane.b32.xlu0 %v471, 126
    %v503 = vpop.permute.xlu0 %502
    %504 = vrot.lane.b32.xlu0 %v473, 126
    %v505 = vpop.permute.xlu0 %504
    %506 = vrot.lane.b32.xlu0 %v475, 126
    %v507 = vpop.permute.xlu0 %506
    %508 = vrot.lane.b32.xlu0 %v477, 126
    %v509 = vpop.permute.xlu0 %508
    %v526 = vadd.f32 %v392, %v479
    %v527 = vadd.f32 %v393, %v481
    %v528 = vadd.f32 %v394, %v483
    %v529 = vadd.f32 %v395, %v485
    %v530 = vadd.f32 %v396, %v487
    %v531 = vadd.f32 %v397, %v489
    %v532 = vadd.f32 %v398, %v491
    %v533 = vadd.f32 %v399, %v493
    %v534 = vadd.f32 %v400, %v495
    %v535 = vadd.f32 %v401, %v497
    %v536 = vadd.f32 %v402, %v499
    %v537 = vadd.f32 %v403, %v501
    %v538 = vadd.f32 %v404, %v503
    %v539 = vadd.f32 %v405, %v505
    %v540 = vadd.f32 %v406, %v507
    %v541 = vadd.f32 %v407, %v509
    %v542 = vmul.f32 %v23, -0.1875
    %v543 = vmul.f32 %v32, -0.1875
    %vm546 = vcmask 1045504
    %v547 = vrot.slane %v33, 2
    %v548 = vrot.slane %v34, 2
    %v549 = vsel %vm546, %v547, %v548
    %v550 = vrot.slane %v35, 2
    %v551 = vsel %vm546, %v548, %v550
    %v552 = vrot.slane %v36, 2
    %v553 = vsel %vm546, %v550, %v552
    %v554 = vrot.slane %v37, 2
    %v555 = vsel %vm546, %v552, %v554
    %v556 = vrot.slane %v38, 2
    %v557 = vsel %vm546, %v554, %v556
    %v558 = vrot.slane %v39, 2
    %v559 = vsel %vm546, %v556, %v558
    %v560 = vrot.slane %v40, 2
    %v561 = vsel %vm546, %v558, %v560
    %v562 = vrot.slane %v542, 2
    %v563 = vsel %vm546, %v560, %v562
    %v564 = vrot.slane %v41, 2
    %v565 = vrot.slane %v42, 2
    %v566 = vsel %vm546, %v564, %v565
    %v567 = vrot.slane %v43, 2
    %v568 = vsel %vm546, %v565, %v567
    %v569 = vrot.slane %v44, 2
    %v570 = vsel %vm546, %v567, %v569
    %v571 = vrot.slane %v45, 2
    %v572 = vsel %vm546, %v569, %v571
    %v573 = vrot.slane %v46, 2
    %v574 = vsel %vm546, %v571, %v573
    %v575 = vrot.slane %v47, 2
    %v576 = vsel %vm546, %v573, %v575
    %v577 = vrot.slane %v48, 2
    %v578 = vsel %vm546, %v575, %v577
    %v579 = vrot.slane %v543, 2
    %v580 = vsel %vm546, %v577, %v579
    %v597 = vadd.f32 %v526, %v549
    %v598 = vadd.f32 %v527, %v551
    %v599 = vadd.f32 %v528, %v553
    %v600 = vadd.f32 %v529, %v555
    %v601 = vadd.f32 %v530, %v557
    %v602 = vadd.f32 %v531, %v559
    %v603 = vadd.f32 %v532, %v561
    %v604 = vadd.f32 %v533, %v563
    %v605 = vadd.f32 %v534, %v566
    %v606 = vadd.f32 %v535, %v568
    %v607 = vadd.f32 %v536, %v570
    %v608 = vadd.f32 %v537, %v572
    %v609 = vadd.f32 %v538, %v574
    %v610 = vadd.f32 %v539, %v576
    %v611 = vadd.f32 %v540, %v578
    %v612 = vadd.f32 %v541, %v580
    %v613 = vmul.f32 %v23, 0.1875
    %v614 = vmul.f32 %v32, 0.1875
    %v617 = vrot.slane %v161, 2
    %v618 = vrot.slane %v162, 2
    %v619 = vsel %vm546, %v617, %v618
    %v620 = vrot.slane %v163, 2
    %v621 = vsel %vm546, %v618, %v620
    %v622 = vrot.slane %v164, 2
    %v623 = vsel %vm546, %v620, %v622
    %v624 = vrot.slane %v165, 2
    %v625 = vsel %vm546, %v622, %v624
    %v626 = vrot.slane %v166, 2
    %v627 = vsel %vm546, %v624, %v626
    %v628 = vrot.slane %v167, 2
    %v629 = vsel %vm546, %v626, %v628
    %v630 = vrot.slane %v168, 2
    %v631 = vsel %vm546, %v628, %v630
    %v632 = vrot.slane %v613, 2
    %v633 = vsel %vm546, %v630, %v632
    %v634 = vrot.slane %v169, 2
    %v635 = vrot.slane %v170, 2
    %v636 = vsel %vm546, %v634, %v635
    %v637 = vrot.slane %v171, 2
    %v638 = vsel %vm546, %v635, %v637
    %v639 = vrot.slane %v172, 2
    %v640 = vsel %vm546, %v637, %v639
    %v641 = vrot.slane %v173, 2
    %v642 = vsel %vm546, %v639, %v641
    %v643 = vrot.slane %v174, 2
    %v644 = vsel %vm546, %v641, %v643
    %v645 = vrot.slane %v175, 2
    %v646 = vsel %vm546, %v643, %v645
    %v647 = vrot.slane %v176, 2
    %v648 = vsel %vm546, %v645, %v647
    %v649 = vrot.slane %v614, 2
    %v650 = vsel %vm546, %v647, %v649
    %v667 = vadd.f32 %v321, %v619
    %v668 = vadd.f32 %v322, %v621
    %v669 = vadd.f32 %v323, %v623
    %v670 = vadd.f32 %v324, %v625
    %v671 = vadd.f32 %v325, %v627
    %v672 = vadd.f32 %v326, %v629
    %v673 = vadd.f32 %v327, %v631
    %v674 = vadd.f32 %v328, %v633
    %v675 = vadd.f32 %v329, %v636
    %v676 = vadd.f32 %v330, %v638
    %v677 = vadd.f32 %v331, %v640
    %v678 = vadd.f32 %v332, %v642
    %v679 = vadd.f32 %v333, %v644
    %v680 = vadd.f32 %v334, %v646
    %v681 = vadd.f32 %v335, %v648
    %v682 = vadd.f32 %v336, %v650
    %v683 = vrot.slane %v408, 2
    %v684 = vrot.slane %v409, 2
    %v685 = vsel %vm546, %v683, %v684
    %v686 = vrot.slane %v410, 2
    %v687 = vsel %vm546, %v684, %v686
    %v688 = vrot.slane %v411, 2
    %v689 = vsel %vm546, %v686, %v688
    %v690 = vrot.slane %v412, 2
    %v691 = vsel %vm546, %v688, %v690
    %v692 = vrot.slane %v413, 2
    %v693 = vsel %vm546, %v690, %v692
    %v694 = vrot.slane %v414, 2
    %v695 = vsel %vm546, %v692, %v694
    %v696 = vrot.slane %v415, 2
    %v697 = vsel %vm546, %v694, %v696
    %v698 = vrot.slane %v416, 2
    %v699 = vsel %vm546, %v696, %v698
    %v700 = vrot.slane %v417, 2
    %v701 = vrot.slane %v418, 2
    %v702 = vsel %vm546, %v700, %v701
    %v703 = vrot.slane %v419, 2
    %v704 = vsel %vm546, %v701, %v703
    %v705 = vrot.slane %v420, 2
    %v706 = vsel %vm546, %v703, %v705
    %v707 = vrot.slane %v421, 2
    %v708 = vsel %vm546, %v705, %v707
    %v709 = vrot.slane %v422, 2
    %v710 = vsel %vm546, %v707, %v709
    %v711 = vrot.slane %v423, 2
    %v712 = vsel %vm546, %v709, %v711
    %v713 = vrot.slane %v424, 2
    %v714 = vsel %vm546, %v711, %v713
    %v715 = vrot.slane %v425, 2
    %v716 = vsel %vm546, %v713, %v715
    %717 = vrot.lane.b32.xlu0 %v685, 127
    %v718 = vpop.permute.xlu0 %717
    %719 = vrot.lane.b32.xlu0 %v687, 127
    %v720 = vpop.permute.xlu0 %719
    %721 = vrot.lane.b32.xlu0 %v689, 127
    %v722 = vpop.permute.xlu0 %721
    %723 = vrot.lane.b32.xlu0 %v691, 127
    %v724 = vpop.permute.xlu0 %723
    %725 = vrot.lane.b32.xlu0 %v693, 127
    %v726 = vpop.permute.xlu0 %725
    %727 = vrot.lane.b32.xlu0 %v695, 127
    %v728 = vpop.permute.xlu0 %727
    %729 = vrot.lane.b32.xlu0 %v697, 127
    %v730 = vpop.permute.xlu0 %729
    %731 = vrot.lane.b32.xlu0 %v699, 127
    %v732 = vpop.permute.xlu0 %731
    %733 = vrot.lane.b32.xlu0 %v702, 127
    %v734 = vpop.permute.xlu0 %733
    %735 = vrot.lane.b32.xlu0 %v704, 127
    %v736 = vpop.permute.xlu0 %735
    %737 = vrot.lane.b32.xlu0 %v706, 127
    %v738 = vpop.permute.xlu0 %737
    %739 = vrot.lane.b32.xlu0 %v708, 127
    %v740 = vpop.permute.xlu0 %739
    %741 = vrot.lane.b32.xlu0 %v710, 127
    %v742 = vpop.permute.xlu0 %741
    %743 = vrot.lane.b32.xlu0 %v712, 127
    %v744 = vpop.permute.xlu0 %743
    %745 = vrot.lane.b32.xlu0 %v714, 127
    %v746 = vpop.permute.xlu0 %745
    %747 = vrot.lane.b32.xlu0 %v716, 127
    %v748 = vpop.permute.xlu0 %747
    %v765 = vadd.f32 %v667, %v718
    %v766 = vadd.f32 %v668, %v720
    %v767 = vadd.f32 %v669, %v722
    %v768 = vadd.f32 %v670, %v724
    %v769 = vadd.f32 %v671, %v726
    %v770 = vadd.f32 %v672, %v728
    %v771 = vadd.f32 %v673, %v730
    %v772 = vadd.f32 %v674, %v732
    %v773 = vadd.f32 %v675, %v734
    %v774 = vadd.f32 %v676, %v736
    %v775 = vadd.f32 %v677, %v738
    %v776 = vadd.f32 %v678, %v740
    %v777 = vadd.f32 %v679, %v742
    %v778 = vadd.f32 %v680, %v744
    %v779 = vadd.f32 %v681, %v746
    %v780 = vadd.f32 %v682, %v748
    %781 = vrot.lane.b32.xlu0 %v619, 126
    %v782 = vpop.permute.xlu0 %781
    %783 = vrot.lane.b32.xlu0 %v621, 126
    %v784 = vpop.permute.xlu0 %783
    %785 = vrot.lane.b32.xlu0 %v623, 126
    %v786 = vpop.permute.xlu0 %785
    %787 = vrot.lane.b32.xlu0 %v625, 126
    %v788 = vpop.permute.xlu0 %787
    %789 = vrot.lane.b32.xlu0 %v627, 126
    %v790 = vpop.permute.xlu0 %789
    %791 = vrot.lane.b32.xlu0 %v629, 126
    %v792 = vpop.permute.xlu0 %791
    %793 = vrot.lane.b32.xlu0 %v631, 126
    %v794 = vpop.permute.xlu0 %793
    %795 = vrot.lane.b32.xlu0 %v633, 126
    %v796 = vpop.permute.xlu0 %795
    %797 = vrot.lane.b32.xlu0 %v636, 126
    %v798 = vpop.permute.xlu0 %797
    %799 = vrot.lane.b32.xlu0 %v638, 126
    %v800 = vpop.permute.xlu0 %799
    %801 = vrot.lane.b32.xlu0 %v640, 126
    %v802 = vpop.permute.xlu0 %801
    %803 = vrot.lane.b32.xlu0 %v642, 126
    %v804 = vpop.permute.xlu0 %803
    %805 = vrot.lane.b32.xlu0 %v644, 126
    %v806 = vpop.permute.xlu0 %805
    %807 = vrot.lane.b32.xlu0 %v646, 126
    %v808 = vpop.permute.xlu0 %807
    %809 = vrot.lane.b32.xlu0 %v648, 126
    %v810 = vpop.permute.xlu0 %809
    %811 = vrot.lane.b32.xlu0 %v650, 126
    %v812 = vpop.permute.xlu0 %811
    %v829 = vadd.f32 %v597, %v782
    %v830 = vadd.f32 %v598, %v784
    %v831 = vadd.f32 %v599, %v786
    %v832 = vadd.f32 %v600, %v788
    %v833 = vadd.f32 %v601, %v790
    %v834 = vadd.f32 %v602, %v792
    %v835 = vadd.f32 %v603, %v794
    %v836 = vadd.f32 %v604, %v796
    %v837 = vadd.f32 %v605, %v798
    %v838 = vadd.f32 %v606, %v800
    %v839 = vadd.f32 %v607, %v802
    %v840 = vadd.f32 %v608, %v804
    %v841 = vadd.f32 %v609, %v806
    %v842 = vadd.f32 %v610, %v808
    %v843 = vadd.f32 %v611, %v810
    %v844 = vadd.f32 %v612, %v812
    %v845 = vadd.f32 %v765, %v782
    %v846 = vadd.f32 %v766, %v784
    %v847 = vadd.f32 %v767, %v786
    %v848 = vadd.f32 %v768, %v788
    %v849 = vadd.f32 %v769, %v790
    %v850 = vadd.f32 %v770, %v792
    %v851 = vadd.f32 %v771, %v794
    %v852 = vadd.f32 %v772, %v796
    %v853 = vadd.f32 %v773, %v798
    %v854 = vadd.f32 %v774, %v800
    %v855 = vadd.f32 %v775, %v802
    %v856 = vadd.f32 %v776, %v804
    %v857 = vadd.f32 %v777, %v806
    %v858 = vadd.f32 %v778, %v808
    %v859 = vadd.f32 %v779, %v810
    %v860 = vadd.f32 %v780, %v812
    %v861 = vmul.f32 %v829, %v829
    %v862 = vmul.f32 %v830, %v830
    %v863 = vmul.f32 %v831, %v831
    %v864 = vmul.f32 %v832, %v832
    %v865 = vmul.f32 %v833, %v833
    %v866 = vmul.f32 %v834, %v834
    %v867 = vmul.f32 %v835, %v835
    %v868 = vmul.f32 %v836, %v836
    %v869 = vmul.f32 %v837, %v837
    %v870 = vmul.f32 %v838, %v838
    %v871 = vmul.f32 %v839, %v839
    %v872 = vmul.f32 %v840, %v840
    %v873 = vmul.f32 %v841, %v841
    %v874 = vmul.f32 %v842, %v842
    %v875 = vmul.f32 %v843, %v843
    %v876 = vmul.f32 %v844, %v844
    %v877 = vmul.f32 %v845, %v845
    %v878 = vmul.f32 %v846, %v846
    %v879 = vmul.f32 %v847, %v847
    %v880 = vmul.f32 %v848, %v848
    %v881 = vmul.f32 %v849, %v849
    %v882 = vmul.f32 %v850, %v850
    %v883 = vmul.f32 %v851, %v851
    %v884 = vmul.f32 %v852, %v852
    %v885 = vmul.f32 %v853, %v853
    %v886 = vmul.f32 %v854, %v854
    %v887 = vmul.f32 %v855, %v855
    %v888 = vmul.f32 %v856, %v856
    %v889 = vmul.f32 %v857, %v857
    %v890 = vmul.f32 %v858, %v858
    %v891 = vmul.f32 %v859, %v859
    %v892 = vmul.f32 %v860, %v860
    %v893 = vadd.f32 %v861, %v877
    %v894 = vadd.f32 %v862, %v878
    %v895 = vadd.f32 %v863, %v879
    %v896 = vadd.f32 %v864, %v880
    %v897 = vadd.f32 %v865, %v881
    %v898 = vadd.f32 %v866, %v882
    %v899 = vadd.f32 %v867, %v883
    %v900 = vadd.f32 %v868, %v884
    %v901 = vadd.f32 %v869, %v885
    %v902 = vadd.f32 %v870, %v886
    %v903 = vadd.f32 %v871, %v887
    %v904 = vadd.f32 %v872, %v888
    %v905 = vadd.f32 %v873, %v889
    %v906 = vadd.f32 %v874, %v890
    %v907 = vadd.f32 %v875, %v891
    %v908 = vadd.f32 %v876, %v892
    %v909 = vrsqrt.pop %v893
    %v910 = vmul.f32 %v893, %v909
    %vm911 = vcmp.eq.f32.partialorder %v893, inf
    %v912 = vsel %vm911, %v893, %v910
    %vm913 = vcmp.eq.f32.partialorder %v893, 0.0
    %v914 = vand.u32 %v893, 2147483648
    %v915 = vsel %vm913, %v914, %v912
    %v916 = vrsqrt.pop %v894
    %v917 = vmul.f32 %v894, %v916
    %vm918 = vcmp.eq.f32.partialorder %v894, inf
    %v919 = vsel %vm918, %v894, %v917
    %vm920 = vcmp.eq.f32.partialorder %v894, 0.0
    %v921 = vand.u32 %v894, 2147483648
    %v922 = vsel %vm920, %v921, %v919
    %v923 = vrsqrt.pop %v895
    %v924 = vmul.f32 %v895, %v923
    %vm925 = vcmp.eq.f32.partialorder %v895, inf
    %v926 = vsel %vm925, %v895, %v924
    %vm927 = vcmp.eq.f32.partialorder %v895, 0.0
    %v928 = vand.u32 %v895, 2147483648
    %v929 = vsel %vm927, %v928, %v926
    %v930 = vrsqrt.pop %v896
    %v931 = vmul.f32 %v896, %v930
    %vm932 = vcmp.eq.f32.partialorder %v896, inf
    %v933 = vsel %vm932, %v896, %v931
    %vm934 = vcmp.eq.f32.partialorder %v896, 0.0
    %v935 = vand.u32 %v896, 2147483648
    %v936 = vsel %vm934, %v935, %v933
    %v937 = vrsqrt.pop %v897
    %v938 = vmul.f32 %v897, %v937
    %vm939 = vcmp.eq.f32.partialorder %v897, inf
    %v940 = vsel %vm939, %v897, %v938
    %vm941 = vcmp.eq.f32.partialorder %v897, 0.0
    %v942 = vand.u32 %v897, 2147483648
    %v943 = vsel %vm941, %v942, %v940
    %v944 = vrsqrt.pop %v898
    %v945 = vmul.f32 %v898, %v944
    %vm946 = vcmp.eq.f32.partialorder %v898, inf
    %v947 = vsel %vm946, %v898, %v945
    %vm948 = vcmp.eq.f32.partialorder %v898, 0.0
    %v949 = vand.u32 %v898, 2147483648
    %v950 = vsel %vm948, %v949, %v947
    %v951 = vrsqrt.pop %v899
    %v952 = vmul.f32 %v899, %v951
    %vm953 = vcmp.eq.f32.partialorder %v899, inf
    %v954 = vsel %vm953, %v899, %v952
    %vm955 = vcmp.eq.f32.partialorder %v899, 0.0
    %v956 = vand.u32 %v899, 2147483648
    %v957 = vsel %vm955, %v956, %v954
    %v958 = vrsqrt.pop %v900
    %v959 = vmul.f32 %v900, %v958
    %vm960 = vcmp.eq.f32.partialorder %v900, inf
    %v961 = vsel %vm960, %v900, %v959
    %vm962 = vcmp.eq.f32.partialorder %v900, 0.0
    %v963 = vand.u32 %v900, 2147483648
    %v964 = vsel %vm962, %v963, %v961
    %v965 = vrsqrt.pop %v901
    %v966 = vmul.f32 %v901, %v965
    %vm967 = vcmp.eq.f32.partialorder %v901, inf
    %v968 = vsel %vm967, %v901, %v966
    %vm969 = vcmp.eq.f32.partialorder %v901, 0.0
    %v970 = vand.u32 %v901, 2147483648
    %v971 = vsel %vm969, %v970, %v968
    %v972 = vrsqrt.pop %v902
    %v973 = vmul.f32 %v902, %v972
    %vm974 = vcmp.eq.f32.partialorder %v902, inf
    %v975 = vsel %vm974, %v902, %v973
    %vm976 = vcmp.eq.f32.partialorder %v902, 0.0
    %v977 = vand.u32 %v902, 2147483648
    %v978 = vsel %vm976, %v977, %v975
    %v979 = vrsqrt.pop %v903
    %v980 = vmul.f32 %v903, %v979
    %vm981 = vcmp.eq.f32.partialorder %v903, inf
    %v982 = vsel %vm981, %v903, %v980
    %vm983 = vcmp.eq.f32.partialorder %v903, 0.0
    %v984 = vand.u32 %v903, 2147483648
    %v985 = vsel %vm983, %v984, %v982
    %v986 = vrsqrt.pop %v904
    %v987 = vmul.f32 %v904, %v986
    %vm988 = vcmp.eq.f32.partialorder %v904, inf
    %v989 = vsel %vm988, %v904, %v987
    %vm990 = vcmp.eq.f32.partialorder %v904, 0.0
    %v991 = vand.u32 %v904, 2147483648
    %v992 = vsel %vm990, %v991, %v989
    %v993 = vrsqrt.pop %v905
    %v994 = vmul.f32 %v905, %v993
    %vm995 = vcmp.eq.f32.partialorder %v905, inf
    %v996 = vsel %vm995, %v905, %v994
    %vm997 = vcmp.eq.f32.partialorder %v905, 0.0
    %v998 = vand.u32 %v905, 2147483648
    %v999 = vsel %vm997, %v998, %v996
    %v1000 = vrsqrt.pop %v906
    %v1001 = vmul.f32 %v906, %v1000
    %vm1002 = vcmp.eq.f32.partialorder %v906, inf
    %v1003 = vsel %vm1002, %v906, %v1001
    %vm1004 = vcmp.eq.f32.partialorder %v906, 0.0
    %v1005 = vand.u32 %v906, 2147483648
    %v1006 = vsel %vm1004, %v1005, %v1003
    %v1007 = vrsqrt.pop %v907
    %v1008 = vmul.f32 %v907, %v1007
    %vm1009 = vcmp.eq.f32.partialorder %v907, inf
    %v1010 = vsel %vm1009, %v907, %v1008
    %vm1011 = vcmp.eq.f32.partialorder %v907, 0.0
    %v1012 = vand.u32 %v907, 2147483648
    %v1013 = vsel %vm1011, %v1012, %v1010
    %v1014 = vrsqrt.pop %v908
    %v1015 = vmul.f32 %v908, %v1014
    %vm1016 = vcmp.eq.f32.partialorder %v908, inf
    %v1017 = vsel %vm1016, %v908, %v1015
    %vm1018 = vcmp.eq.f32.partialorder %v908, 0.0
    %v1019 = vand.u32 %v908, 2147483648
    %v1020 = vsel %vm1018, %v1019, %v1017
    %v1021 = vld [vmem:[%s1] sm:$0xff]
    %v1022 = vld [vmem:[%s1 + $0x8] sm:$0xff]
    %v1023 = vld [vmem:[%s1 + $0x10] sm:$0xff]
    %v1024 = vld [vmem:[%s1 + $0x18] sm:$0xff]
    %v1025 = vld [vmem:[%s1 + $0x20] sm:$0xff]
    %v1026 = vld [vmem:[%s1 + $0x28] sm:$0xff]
    %v1027 = vld [vmem:[%s1 + $0x30] sm:$0xff]
    %v1028 = vld [vmem:[%s1 + $0x38] sm:$0xff]
    %v1029 = vld [vmem:[%s1 + $0x40] sm:$0xff]
    %v1030 = vld [vmem:[%s1 + $0x48] sm:$0xff]
    %v1031 = vld [vmem:[%s1 + $0x50] sm:$0xff]
    %v1032 = vld [vmem:[%s1 + $0x58] sm:$0xff]
    %v1033 = vld [vmem:[%s1 + $0x60] sm:$0xff]
    %v1034 = vld [vmem:[%s1 + $0x68] sm:$0xff]
    %v1035 = vld [vmem:[%s1 + $0x70] sm:$0xff]
    %v1036 = vld [vmem:[%s1 + $0x78] sm:$0xff]
    %v1037 = vmul.f32 %v1021, 2.0
    %v1038 = vmul.f32 %v1022, 2.0
    %v1039 = vmul.f32 %v1023, 2.0
    %v1040 = vmul.f32 %v1024, 2.0
    %v1041 = vmul.f32 %v1025, 2.0
    %v1042 = vmul.f32 %v1026, 2.0
    %v1043 = vmul.f32 %v1027, 2.0
    %v1044 = vmul.f32 %v1028, 2.0
    %v1045 = vmul.f32 %v1037, %v1029
    %v1046 = vmul.f32 %v1038, %v1030
    %v1047 = vmul.f32 %v1039, %v1031
    %v1048 = vmul.f32 %v1040, %v1032
    %v1049 = vmul.f32 %v1041, %v1033
    %v1050 = vmul.f32 %v1042, %v1034
    %v1051 = vmul.f32 %v1043, %v1035
    %v1052 = vmul.f32 %v1044, %v1036
    %v1053 = vadd.f32 %v1045, 0.4
    %v1054 = vadd.f32 %v1046, 0.4
    %v1055 = vadd.f32 %v1047, 0.4
    %v1056 = vadd.f32 %v1048, 0.4
    %v1057 = vadd.f32 %v1049, 0.4
    %v1058 = vadd.f32 %v1050, 0.4
    %v1059 = vadd.f32 %v1051, 0.4
    %v1060 = vadd.f32 %v1052, 0.4
    %v1061 = vmul.f32 %v1021, %v1021
    %v1062 = vmul.f32 %v1022, %v1022
    %v1063 = vmul.f32 %v1023, %v1023
    %v1064 = vmul.f32 %v1024, %v1024
    %v1065 = vmul.f32 %v1025, %v1025
    %v1066 = vmul.f32 %v1026, %v1026
    %v1067 = vmul.f32 %v1027, %v1027
    %v1068 = vmul.f32 %v1028, %v1028
    %v1069 = vmul.f32 %v1029, %v1029
    %v1070 = vmul.f32 %v1030, %v1030
    %v1071 = vmul.f32 %v1031, %v1031
    %v1072 = vmul.f32 %v1032, %v1032
    %v1073 = vmul.f32 %v1033, %v1033
    %v1074 = vmul.f32 %v1034, %v1034
    %v1075 = vmul.f32 %v1035, %v1035
    %v1076 = vmul.f32 %v1036, %v1036
    %v1077 = vadd.f32 %v1061, %v1069
    %v1078 = vadd.f32 %v1062, %v1070
    %v1079 = vadd.f32 %v1063, %v1071
    %v1080 = vadd.f32 %v1064, %v1072
    %v1081 = vadd.f32 %v1065, %v1073
    %v1082 = vadd.f32 %v1066, %v1074
    %v1083 = vadd.f32 %v1067, %v1075
    %v1084 = vadd.f32 %v1068, %v1076
    %v1085 = vadd.f32 %v1077, 0.4
    %v1086 = vadd.f32 %v1078, 0.4
    %v1087 = vadd.f32 %v1079, 0.4
    %v1088 = vadd.f32 %v1080, 0.4
    %v1089 = vadd.f32 %v1081, 0.4
    %v1090 = vadd.f32 %v1082, 0.4
    %v1091 = vadd.f32 %v1083, 0.4
    %v1092 = vadd.f32 %v1084, 0.4
    %v1093 = vrcp.pop %v1085
    %v1094 = vrcp.pop %v1086
    %v1095 = vrcp.pop %v1087
    %v1096 = vrcp.pop %v1088
    %v1097 = vrcp.pop %v1089
    %v1098 = vrcp.pop %v1090
    %v1099 = vrcp.pop %v1091
    %v1100 = vrcp.pop %v1092
    %v1101 = vmul.f32 %v1053, %v1093
    %v1102 = vmul.f32 %v1054, %v1094
    %v1103 = vmul.f32 %v1055, %v1095
    %v1104 = vmul.f32 %v1056, %v1096
    %v1105 = vmul.f32 %v1057, %v1097
    %v1106 = vmul.f32 %v1058, %v1098
    %v1107 = vmul.f32 %v1059, %v1099
    %v1108 = vmul.f32 %v1060, %v1100
    %v1109 = vmul.f32 %v915, 2.0
    %v1110 = vmul.f32 %v922, 2.0
    %v1111 = vmul.f32 %v929, 2.0
    %v1112 = vmul.f32 %v936, 2.0
    %v1113 = vmul.f32 %v943, 2.0
    %v1114 = vmul.f32 %v950, 2.0
    %v1115 = vmul.f32 %v957, 2.0
    %v1116 = vmul.f32 %v964, 2.0
    %v1117 = vmul.f32 %v1109, %v971
    %v1118 = vmul.f32 %v1110, %v978
    %v1119 = vmul.f32 %v1111, %v985
    %v1120 = vmul.f32 %v1112, %v992
    %v1121 = vmul.f32 %v1113, %v999
    %v1122 = vmul.f32 %v1114, %v1006
    %v1123 = vmul.f32 %v1115, %v1013
    %v1124 = vmul.f32 %v1116, %v1020
    %v1125 = vadd.f32 %v1117, 225.0
    %v1126 = vadd.f32 %v1118, 225.0
    %v1127 = vadd.f32 %v1119, 225.0
    %v1128 = vadd.f32 %v1120, 225.0
    %v1129 = vadd.f32 %v1121, 225.0
    %v1130 = vadd.f32 %v1122, 225.0
    %v1131 = vadd.f32 %v1123, 225.0
    %v1132 = vadd.f32 %v1124, 225.0
    %v1133 = vmul.f32 %v915, %v915
    %v1134 = vmul.f32 %v922, %v922
    %v1135 = vmul.f32 %v929, %v929
    %v1136 = vmul.f32 %v936, %v936
    %v1137 = vmul.f32 %v943, %v943
    %v1138 = vmul.f32 %v950, %v950
    %v1139 = vmul.f32 %v957, %v957
    %v1140 = vmul.f32 %v964, %v964
    %v1141 = vmul.f32 %v971, %v971
    %v1142 = vmul.f32 %v978, %v978
    %v1143 = vmul.f32 %v985, %v985
    %v1144 = vmul.f32 %v992, %v992
    %v1145 = vmul.f32 %v999, %v999
    %v1146 = vmul.f32 %v1006, %v1006
    %v1147 = vmul.f32 %v1013, %v1013
    %v1148 = vmul.f32 %v1020, %v1020
    %v1149 = vadd.f32 %v1133, %v1141
    %v1150 = vadd.f32 %v1134, %v1142
    %v1151 = vadd.f32 %v1135, %v1143
    %v1152 = vadd.f32 %v1136, %v1144
    %v1153 = vadd.f32 %v1137, %v1145
    %v1154 = vadd.f32 %v1138, %v1146
    %v1155 = vadd.f32 %v1139, %v1147
    %v1156 = vadd.f32 %v1140, %v1148
    %v1157 = vadd.f32 %v1149, 225.0
    %v1158 = vadd.f32 %v1150, 225.0
    %v1159 = vadd.f32 %v1151, 225.0
    %v1160 = vadd.f32 %v1152, 225.0
    %v1161 = vadd.f32 %v1153, 225.0
    %v1162 = vadd.f32 %v1154, 225.0
    %v1163 = vadd.f32 %v1155, 225.0
    %v1164 = vadd.f32 %v1156, 225.0
    %v1165 = vrcp.pop %v1157
    %v1166 = vrcp.pop %v1158
    %v1167 = vrcp.pop %v1159
    %v1168 = vrcp.pop %v1160
    %v1169 = vrcp.pop %v1161
    %v1170 = vrcp.pop %v1162
    %v1171 = vrcp.pop %v1163
    %v1172 = vrcp.pop %v1164
    %v1173 = vmul.f32 %v1125, %v1165
    %v1174 = vmul.f32 %v1126, %v1166
    %v1175 = vmul.f32 %v1127, %v1167
    %v1176 = vmul.f32 %v1128, %v1168
    %v1177 = vmul.f32 %v1129, %v1169
    %v1178 = vmul.f32 %v1130, %v1170
    %v1179 = vmul.f32 %v1131, %v1171
    %v1180 = vmul.f32 %v1132, %v1172
    %v1181 = vmax.f32 %v1021, %v1029
    %v1182 = vmax.f32 %v1022, %v1030
    %v1183 = vmax.f32 %v1023, %v1031
    %v1184 = vmax.f32 %v1024, %v1032
    %v1185 = vmax.f32 %v1025, %v1033
    %v1186 = vmax.f32 %v1026, %v1034
    %v1187 = vmax.f32 %v1027, %v1035
    %v1188 = vmax.f32 %v1028, %v1036
    %v1189 = vrsqrt.pop %v1173
    %v1190 = vmul.f32 %v1173, %v1189
    %vm1191 = vcmp.eq.f32.partialorder %v1173, inf
    %v1192 = vsel %vm1191, %v1173, %v1190
    %vm1193 = vcmp.eq.f32.partialorder %v1173, 0.0
    %v1194 = vand.u32 %v1173, 2147483648
    %v1195 = vsel %vm1193, %v1194, %v1192
    %v1196 = vrsqrt.pop %v1174
    %v1197 = vmul.f32 %v1174, %v1196
    %vm1198 = vcmp.eq.f32.partialorder %v1174, inf
    %v1199 = vsel %vm1198, %v1174, %v1197
    %vm1200 = vcmp.eq.f32.partialorder %v1174, 0.0
    %v1201 = vand.u32 %v1174, 2147483648
    %v1202 = vsel %vm1200, %v1201, %v1199
    %v1203 = vrsqrt.pop %v1175
    %v1204 = vmul.f32 %v1175, %v1203
    %vm1205 = vcmp.eq.f32.partialorder %v1175, inf
    %v1206 = vsel %vm1205, %v1175, %v1204
    %vm1207 = vcmp.eq.f32.partialorder %v1175, 0.0
    %v1208 = vand.u32 %v1175, 2147483648
    %v1209 = vsel %vm1207, %v1208, %v1206
    %v1210 = vrsqrt.pop %v1176
    %v1211 = vmul.f32 %v1176, %v1210
    %vm1212 = vcmp.eq.f32.partialorder %v1176, inf
    %v1213 = vsel %vm1212, %v1176, %v1211
    %vm1214 = vcmp.eq.f32.partialorder %v1176, 0.0
    %v1215 = vand.u32 %v1176, 2147483648
    %v1216 = vsel %vm1214, %v1215, %v1213
    %v1217 = vrsqrt.pop %v1177
    %v1218 = vmul.f32 %v1177, %v1217
    %vm1219 = vcmp.eq.f32.partialorder %v1177, inf
    %v1220 = vsel %vm1219, %v1177, %v1218
    %vm1221 = vcmp.eq.f32.partialorder %v1177, 0.0
    %v1222 = vand.u32 %v1177, 2147483648
    %v1223 = vsel %vm1221, %v1222, %v1220
    %v1224 = vrsqrt.pop %v1178
    %v1225 = vmul.f32 %v1178, %v1224
    %vm1226 = vcmp.eq.f32.partialorder %v1178, inf
    %v1227 = vsel %vm1226, %v1178, %v1225
    %vm1228 = vcmp.eq.f32.partialorder %v1178, 0.0
    %v1229 = vand.u32 %v1178, 2147483648
    %v1230 = vsel %vm1228, %v1229, %v1227
    %v1231 = vrsqrt.pop %v1179
    %v1232 = vmul.f32 %v1179, %v1231
    %vm1233 = vcmp.eq.f32.partialorder %v1179, inf
    %v1234 = vsel %vm1233, %v1179, %v1232
    %vm1235 = vcmp.eq.f32.partialorder %v1179, 0.0
    %v1236 = vand.u32 %v1179, 2147483648
    %v1237 = vsel %vm1235, %v1236, %v1234
    %v1238 = vrsqrt.pop %v1180
    %v1239 = vmul.f32 %v1180, %v1238
    %vm1240 = vcmp.eq.f32.partialorder %v1180, inf
    %v1241 = vsel %vm1240, %v1180, %v1239
    %vm1242 = vcmp.eq.f32.partialorder %v1180, 0.0
    %v1243 = vand.u32 %v1180, 2147483648
    %v1244 = vsel %vm1242, %v1243, %v1241
    %v1245 = vmul.f32 %v1101, %v1195
    %v1246 = vmul.f32 %v1102, %v1202
    %v1247 = vmul.f32 %v1103, %v1209
    %v1248 = vmul.f32 %v1104, %v1216
    %v1249 = vmul.f32 %v1105, %v1223
    %v1250 = vmul.f32 %v1106, %v1230
    %v1251 = vmul.f32 %v1107, %v1237
    %v1252 = vmul.f32 %v1108, %v1244
    %v1253 = vmul.f32 %v1245, %v1181
    %v1254 = vmul.f32 %v1246, %v1182
    %v1255 = vmul.f32 %v1247, %v1183
    %v1256 = vmul.f32 %v1248, %v1184
    %v1257 = vmul.f32 %v1249, %v1185
    %v1258 = vmul.f32 %v1250, %v1186
    %v1259 = vmul.f32 %v1251, %v1187
    %v1260 = vmul.f32 %v1252, %v1188
    %vm1261 = vcmask 523264
    %v1262 = vsel %vm1261, %v1253, 0.0
    %v1263 = vsel %vm1261, %v1254, 0.0
    %v1264 = vadd.f32 %v1262, %v1263
    %v1265 = vsel %vm1261, %v1255, 0.0
    %v1266 = vadd.f32 %v1264, %v1265
    %v1267 = vsel %vm1261, %v1256, 0.0
    %v1268 = vadd.f32 %v1266, %v1267
    %v1269 = vsel %vm1261, %v1257, 0.0
    %v1270 = vadd.f32 %v1268, %v1269
    %v1271 = vsel %vm1261, %v1258, 0.0
    %v1272 = vadd.f32 %v1270, %v1271
    %v1273 = vsel %vm1261, %v1259, 0.0
    %v1274 = vadd.f32 %v1272, %v1273
    %v1275 = vsel %vm1261, %v1260, 0.0
    %v1276 = vadd.f32 %v1274, %v1275
    %1277 = vadd.xlane.f32.xlu0 %v1276
    %v1278 = vpop.xlane.xlu0 %1277
    %v1279 = vrot.slane %v1278, 4
    %v1280 = vadd.f32 %v1278, %v1279
    %v1281 = vrot.slane %v1280, 2
    %v1282 = vadd.f32 %v1280, %v1281
    %v1283 = vrot.slane %v1282, 1
    %v1284 = vadd.f32 %v1282, %v1283
    %s1285 = vtos %v1284
    %s1286 = scalar_lea.smem [#allocation2], 0
    %1287 = sst [smem:[%s1286]] %s1285
    %v1288 = vsel %vm1261, %v1181, 0.0
    %v1289 = vsel %vm1261, %v1182, 0.0
    %v1290 = vadd.f32 %v1288, %v1289
    %v1291 = vsel %vm1261, %v1183, 0.0
    %v1292 = vadd.f32 %v1290, %v1291
    %v1293 = vsel %vm1261, %v1184, 0.0
    %v1294 = vadd.f32 %v1292, %v1293
    %v1295 = vsel %vm1261, %v1185, 0.0
    %v1296 = vadd.f32 %v1294, %v1295
    %v1297 = vsel %vm1261, %v1186, 0.0
    %v1298 = vadd.f32 %v1296, %v1297
    %v1299 = vsel %vm1261, %v1187, 0.0
    %v1300 = vadd.f32 %v1298, %v1299
    %v1301 = vsel %vm1261, %v1188, 0.0
    %v1302 = vadd.f32 %v1300, %v1301
    %1303 = vadd.xlane.f32.xlu0 %v1302
    %v1304 = vpop.xlane.xlu0 %1303
    %v1305 = vrot.slane %v1304, 4
    %v1306 = vadd.f32 %v1304, %v1305
    %v1307 = vrot.slane %v1306, 2
    %v1308 = vadd.f32 %v1306, %v1307
    %v1309 = vrot.slane %v1308, 1
    %v1310 = vadd.f32 %v1308, %v1309
    %s1311 = vtos %v1310
    %s1312 = scalar_lea.smem [#allocation4], 0
    %1313 = sst [smem:[%s1312]] %s1311
    // Predicated region
    $region10: #{_lambda_.5} parent=1 // pred_check
      _
    $region11: #{_lambda_.5} parent=1 // pred_check_branch
      %1315 = sbr.rel (0) target = $region13
    $region12: #{_lambda_.5} parent=1 // pred_region
      %s1317 = ssub.s32 16, 16
      %1318 = vsyncadd [#allocation3], %s1317
      %1321 = dma.smem_to_hbm [#allocation2], 16, %s2, [#allocation3]
    $region13: #{_lambda_.5} parent=1 // pred_fallthru
      _
    // Predicated region
    $region14: #{_lambda_.5} parent=1 // pred_check
      _
    $region15: #{_lambda_.5} parent=1 // pred_check_branch
      %1323 = sbr.rel (0) target = $region17
    $region16: #{_lambda_.5} parent=1 // pred_region
      %s1325 = ssub.s32 16, 16
      %1326 = vsyncadd [#allocation5], %s1325
      %1329 = dma.smem_to_hbm [#allocation4], 16, %s3, [#allocation5]
    $region17: #{_lambda_.5} parent=1 // pred_fallthru
      _
    // Predicated region
    $region18: #{_lambda_.5} parent=1 // pred_check
      _
    $region19: #{_lambda_.5} parent=1 // pred_check_branch
      %1331 = sbr.rel (0) target = $region21
    $region20: #{_lambda_.5} parent=1 // pred_region
      %1332 = dma.done [#allocation3], 16
    $region21: #{_lambda_.5} parent=1 // pred_fallthru
      _
    // Predicated region
    $region22: #{_lambda_.5} parent=1 // pred_check
      _
    $region23: #{_lambda_.5} parent=1 // pred_check_branch
      %1334 = sbr.rel (0) target = $region25
    $region24: #{_lambda_.5} parent=1 // pred_region
      %1335 = dma.done [#allocation5], 16
    $region25: #{_lambda_.5} parent=1 // pred_fallthru
      _
    %1336 = sfence
    %1337 = vsyncpa [#allocation3], 1
    %1338 = vsyncpa [#allocation5], 1

</llo_original>
